<compile_context>
chip_gen: v6e
topology: v6e:2x2x1
jax: 0.10.0
libtpu: 0.0.40
codegen_flags: <defaults>
</compile_context>

<pallas_src>
import jax
import jax.numpy as jnp
from jax import lax
from jax.experimental import pallas as pl
from jax.experimental.pallas import tpu as pltpu

C = 7                 # channels (hard-coded to 7 in the PyTorch module)
K = 5                 # kernel size
D1, D2 = 1, 5         # dilations
PAD1 = D1 * (K - 1)   # 4  : causal left context for conv_dilated1
PAD2 = D2 * (K - 1)   # 20 : causal left context for conv_dilated2
PAD = PAD1 + PAD2     # 24 : total left context needed per time tile
HALO = 128            # lane-aligned halo sideband (>= PAD); keeps x at a 128-lane offset in xe

# Time-tile size (lanes).  Live f32 intermediates at 32K lanes are ~10-15 MiB including the
# double-buffered in/out blocks -> fits the 48 MiB scoped VMEM limit below on v7x (64 MiB
# physical) and easily on v5e/v6e (128 MiB).  Multiple of 128 -> lane-dense stores.
MAX_TILE = 32 * 1024


def _smooth_kernel(halo_ref, x_ref, w1_ref, b1_ref, w2_ref, b2_ref, w3_ref, b3_ref,
                   o_ref, y1_ref):
    # halo_ref: (1, 1, C, HALO)  left context x[t0-HALO : t0] (zeros for the first tile)
    # x_ref   : (1, C, TT)       current time tile
    # w1/w2   : (K, C, C)        per-tap (Cout, Cin) matrices;  w3: (C, C);  b*: (C, 1)
    # y1_ref  : VMEM scratch (C, TT + PAD2) holding conv_dilated1 output for this tile
    TT = o_ref.shape[-1]
    L1 = TT + PAD2                       # y1 is needed for global times [t0-PAD2, t0+TT)
    x = x_ref[0]                         # (C, TT)
    halo = halo_ref[0, 0]                # (C, HALO)
    # x lands at lane offset HALO=128 -> lane-aligned concat, no relayout of the big tile.
    xe = jnp.concatenate([halo, x], axis=-1)   # (C, HALO + TT); column j = global t0-HALO+j

    # conv_dilated1: causal, kernel 5, dilation 1.  Tap k=0 initializes the accumulator
    # (no jnp.zeros init); one (7,7)@(7,L1) MXU dot per tap.
    base = HALO - PAD2 - PAD1            # 104: xe column of x[t0 - PAD2 - PAD1]
    acc1 = jnp.dot(w1_ref[0], xe[:, base:base + L1], preferred_element_type=jnp.float32)
    for k in range(1, K):
        acc1 += jnp.dot(w1_ref[k], xe[:, base + k:base + k + L1],
                        preferred_element_type=jnp.float32)
    y1_ref[...] = acc1 + b1_ref[...]     # (C, L1); column i = global time t0 - PAD2 + i

    # conv_dilated2's causal zero padding: y1 must be exactly 0 (not b1) at global time < 0.
    # That only affects the first PAD2 columns of the first time tile -> gate with pl.when
    # (tiny masked store) instead of a full-tile iota/compare/select on every grid step.
    @pl.when(pl.program_id(1) == 0)
    def _():
        y1_ref[:, :PAD2] = jnp.zeros((C, PAD2), jnp.float32)

    # conv_dilated2: causal, kernel 5, dilation 5 (taps y1[t-20], ..., y1[t]).
    acc2 = jnp.dot(w2_ref[0], y1_ref[:, 0:TT], preferred_element_type=jnp.float32)
    for k in range(1, K):
        acc2 += jnp.dot(w2_ref[k], y1_ref[:, D2 * k:D2 * k + TT],
                        preferred_element_type=jnp.float32)
    out = jnp.maximum(acc2 + b2_ref[...], 0.0)              # ReLU

    # conv_1x1 (pointwise over channels).
    y3 = jnp.dot(w3_ref[...], out, preferred_element_type=jnp.float32) + b3_ref[...]

    # TODO(synk): nn.Dropout() treated as identity (inference semantics).
    o_ref[0] = x + y3                                       # residual


def dilated_smooth_layer(x, params, *, max_tile=MAX_TILE):
    """x: (N, 7, T) float32 -> (N, 7, T) float32 (causal_conv=True forward, dropout=identity)."""
    N, Cx, T = x.shape
    assert Cx == C
    x = x.astype(jnp.float32)

    # Time-tile selection.  Blocks smaller than the full time axis must be 128-multiples
    # (legal BlockSpec + lane-dense stores); TT >= HALO keeps the halo inside one prev tile.
    if T > max_tile:
        assert max_tile % 128 == 0 and max_tile >= HALO
        TT = max_tile
    elif N == 1 and T > 256:
        # Ensure N * num_t >= 2 so both v7x TensorCores get work (harmless on v5e/v6e).
        TT = 128 * pl.cdiv(pl.cdiv(T, 2), 128)
    else:
        TT = T                                   # single tile: block = full time axis (legal)
    num_t = pl.cdiv(T, TT)
    # Ragged last tile: lanes >= T of the padded input block may hold garbage; correctness
    # relies on strict causality (outputs at t < T only read x at times <= t) + masked stores.
    assert num_t == 1 or (TT % 128 == 0 and TT >= HALO >= PAD)

    # Tiny lane-aligned left-context sideband: halo[:, t] = x[:, :, t*TT-HALO : t*TT] (zeros
    # for t == 0).  Only the last PAD=24 lanes are read; extra HBM traffic ~HALO/TT of input.
    # Built with a single reshape+slice (no Python loop over tiles).
    zeros_head = jnp.zeros((N, 1, C, HALO), jnp.float32)
    if num_t == 1:
        halo = zeros_head
    else:
        ctx = x[:, :, :(num_t - 1) * TT].reshape(N, C, num_t - 1, TT)[:, :, :, TT - HALO:]
        halo = jnp.concatenate([zeros_head, jnp.moveaxis(ctx, 2, 1)], axis=1)  # (N,num_t,C,HALO)

    w1 = jnp.transpose(params["w1"].astype(jnp.float32), (2, 0, 1))   # (K, Cout, Cin)
    w2 = jnp.transpose(params["w2"].astype(jnp.float32), (2, 0, 1))   # (K, Cout, Cin)
    w3 = params["w3"].astype(jnp.float32)[:, :, 0]                    # (Cout, Cin)
    b1 = params["b1"].astype(jnp.float32)[:, None]
    b2 = params["b2"].astype(jnp.float32)[:, None]
    b3 = params["b3"].astype(jnp.float32)[:, None]

    return pl.pallas_call(
        _smooth_kernel,
        out_shape=jax.ShapeDtypeStruct((N, C, T), jnp.float32),
        grid=(N, num_t),
        in_specs=[
            pl.BlockSpec((1, 1, C, HALO), lambda n, t: (n, t, 0, 0)),  # halo sideband
            pl.BlockSpec((1, C, TT), lambda n, t: (n, 0, t)),          # x time tile
            pl.BlockSpec((K, C, C), lambda n, t: (0, 0, 0)),           # w1
            pl.BlockSpec((C, 1), lambda n, t: (0, 0)),                 # b1
            pl.BlockSpec((K, C, C), lambda n, t: (0, 0, 0)),           # w2
            pl.BlockSpec((C, 1), lambda n, t: (0, 0)),                 # b2
            pl.BlockSpec((C, C), lambda n, t: (0, 0)),                 # w3 (1x1)
            pl.BlockSpec((C, 1), lambda n, t: (0, 0)),                 # b3
        ],
        out_specs=pl.BlockSpec((1, C, TT), lambda n, t: (n, 0, t)),
        scratch_shapes=[pltpu.VMEM((C, TT + PAD2), jnp.float32)],      # y1 (conv1 output)
        compiler_params=pltpu.CompilerParams(
            dimension_semantics=("parallel", "parallel"),   # batch x time tiles independent
            vmem_limit_bytes=48 * 1024 * 1024),
    )(halo, x, w1, b1, w2, b2, w3, b3)


def _reference(x, params):
    """Plain-JAX replica of the PyTorch forward (dropout = identity)."""
    dn = lax.conv_dimension_numbers(x.shape, params["w1"].shape, ("NCH", "OIH", "NCH"))
    x1 = lax.conv_general_dilated(x, params["w1"], (1,), [(PAD1, PAD1)],
                                  rhs_dilation=(D1,), dimension_numbers=dn)
    x1 = x1 + params["b1"][None, :, None]
    x1 = x1[:, :, :-PAD1]
    x2 = lax.conv_general_dilated(x1, params["w2"], (1,), [(PAD2, PAD2)],
                                  rhs_dilation=(D2,), dimension_numbers=dn)
    x2 = x2 + params["b2"][None, :, None]
    out = jax.nn.relu(x2)[:, :, :-PAD2]
    out = lax.conv_general_dilated(out, params["w3"], (1,), [(0, 0)],
                                   dimension_numbers=dn)
    out = out + params["b3"][None, :, None]
    return x + out


if __name__ == "__main__":
    key = jax.random.PRNGKey(0)
    ks = jax.random.split(key, 7)

    def uinit(k, shape, fan_in):
        b = 1.0 / jnp.sqrt(float(fan_in))
        return jax.random.uniform(k, shape, jnp.float32, -b, b)

    params = {
        "w1": uinit(ks[0], (C, C, K), C * K),   # Conv1d(7, 7, 5, dilation=1)
        "b1": uinit(ks[1], (C,), C * K),
        "w2": uinit(ks[2], (C, C, K), C * K),   # Conv1d(7, 7, 5, dilation=5)
        "b2": uinit(ks[3], (C,), C * K),
        "w3": uinit(ks[4], (C, C, 1), C),       # Conv1d(7, 7, 1)
        "b3": uinit(ks[5], (C,), C),
    }

    # (N, T, max_tile): single tile; v7x two-tile split (N=1, T<=max_tile); multi-tile even
    # split; multi-tile ragged edge.
    cases = [(2, 16, MAX_TILE), (1, 300, MAX_TILE), (2, 384, 128), (1, 200, 128)]
    for (n, t, mt) in cases:
        xk = jax.random.fold_in(ks[6], t)
        x = jax.random.normal(xk, (n, C, t), jnp.float32)

        y = jax.block_until_ready(dilated_smooth_layer(x, params, max_tile=mt))
        y_ref = _reference(x, params)

        assert y.shape == (n, C, t)
        assert jnp.allclose(y, y_ref, atol=1e-4, rtol=1e-4), f"mismatch vs reference at T={t}"

    print("KERNEL_OK")
</pallas_src>

<mosaic_0001>
module attributes {stable_mosaic.version = 11 : i64} {
  func.func @_smooth_kernel(%arg0: i32, %arg1: i32, %arg2: memref<1x1x7x128xf32, #tpu.memory_space<vmem>>, %arg3: memref<1x7x16xf32, #tpu.memory_space<vmem>>, %arg4: memref<5x7x7xf32, #tpu.memory_space<vmem>>, %arg5: memref<7x1xf32, #tpu.memory_space<vmem>>, %arg6: memref<5x7x7xf32, #tpu.memory_space<vmem>>, %arg7: memref<7x1xf32, #tpu.memory_space<vmem>>, %arg8: memref<7x7xf32, #tpu.memory_space<vmem>>, %arg9: memref<7x1xf32, #tpu.memory_space<vmem>>, %arg10: memref<1x7x16xf32, #tpu.memory_space<vmem>>, %arg11: memref<7x36xf32, #tpu.memory_space<vmem>>) attributes {dimension_semantics = [#tpu.dimension_semantics<parallel>, #tpu.dimension_semantics<parallel>], iteration_bounds = array<i64: 2, 1>, scalar_prefetch = 0 : i64, scratch_operands = 1 : i64, tpu.core_type = #tpu.core_type<tc>, window_params = [{transform_indices = @transform_0, window_bounds = array<i64: 1, 1, 7, 128>}, {transform_indices = @transform_1, window_bounds = array<i64: 1, 7, 16>}, {pipeline_mode = #tpu.pipeline_mode<synchronous>, transform_indices = @transform_2, window_bounds = array<i64: 5, 7, 7>}, {pipeline_mode = #tpu.pipeline_mode<synchronous>, transform_indices = @transform_3, window_bounds = array<i64: 7, 1>}, {pipeline_mode = #tpu.pipeline_mode<synchronous>, transform_indices = @transform_4, window_bounds = array<i64: 5, 7, 7>}, {pipeline_mode = #tpu.pipeline_mode<synchronous>, transform_indices = @transform_5, window_bounds = array<i64: 7, 1>}, {pipeline_mode = #tpu.pipeline_mode<synchronous>, transform_indices = @transform_6, window_bounds = array<i64: 7, 7>}, {pipeline_mode = #tpu.pipeline_mode<synchronous>, transform_indices = @transform_7, window_bounds = array<i64: 7, 1>}, {transform_indices = @transform_8, window_bounds = array<i64: 1, 7, 16>}]} {
    %c0 = arith.constant 0 : index
    %c0_0 = arith.constant 0 : index
    %c0_1 = arith.constant 0 : index
    %0 = vector.load %arg3[%c0, %c0_0, %c0_1] : memref<1x7x16xf32, #tpu.memory_space<vmem>>, vector<1x7x16xf32>
    %1 = vector.shape_cast %0 : vector<1x7x16xf32> to vector<7x16xf32>
    %c0_2 = arith.constant 0 : index
    %c0_3 = arith.constant 0 : index
    %c0_4 = arith.constant 0 : index
    %c0_5 = arith.constant 0 : index
    %2 = vector.load %arg2[%c0_2, %c0_3, %c0_4, %c0_5] : memref<1x1x7x128xf32, #tpu.memory_space<vmem>>, vector<1x1x7x128xf32>
    %3 = vector.shape_cast %2 : vector<1x1x7x128xf32> to vector<7x128xf32>
    %4 = tpu.concatenate %3, %1 in 1 : vector<7x128xf32>, vector<7x16xf32> -> vector<7x144xf32>
    %c0_6 = arith.constant 0 : index
    %c0_7 = arith.constant 0 : index
    %c0_8 = arith.constant 0 : index
    %5 = vector.load %arg4[%c0_6, %c0_7, %c0_8] : memref<5x7x7xf32, #tpu.memory_space<vmem>>, vector<1x7x7xf32>
    %6 = vector.shape_cast %5 : vector<1x7x7xf32> to vector<7x7xf32>
    %7 = vector.extract_strided_slice %4 {offsets = [0, 104], sizes = [7, 36], strides = [1, 1]} : vector<7x144xf32> to vector<7x36xf32>
    %cst = arith.constant dense<0.000000e+00> : vector<7x36xf32>
    %8 = tpu.matmul %6, %7, %cst {dimension_numbers = #tpu.dot_dimension_numbers<[1], [0], [0], [1], [0, 0, 1, 1], [], []>} : vector<7x7xf32>, vector<7x36xf32>, vector<7x36xf32> -> vector<7x36xf32>
    %c1 = arith.constant 1 : index
    %c0_9 = arith.constant 0 : index
    %c0_10 = arith.constant 0 : index
    %9 = vector.load %arg4[%c1, %c0_9, %c0_10] : memref<5x7x7xf32, #tpu.memory_space<vmem>>, vector<1x7x7xf32>
    %10 = vector.shape_cast %9 : vector<1x7x7xf32> to vector<7x7xf32>
    %11 = vector.extract_strided_slice %4 {offsets = [0, 105], sizes = [7, 36], strides = [1, 1]} : vector<7x144xf32> to vector<7x36xf32>
    %cst_11 = arith.constant dense<0.000000e+00> : vector<7x36xf32>
    %12 = tpu.matmul %10, %11, %cst_11 {dimension_numbers = #tpu.dot_dimension_numbers<[1], [0], [0], [1], [0, 0, 1, 1], [], []>} : vector<7x7xf32>, vector<7x36xf32>, vector<7x36xf32> -> vector<7x36xf32>
    %13 = arith.addf %8, %12 : vector<7x36xf32>
    %c2 = arith.constant 2 : index
    %c0_12 = arith.constant 0 : index
    %c0_13 = arith.constant 0 : index
    %14 = vector.load %arg4[%c2, %c0_12, %c0_13] : memref<5x7x7xf32, #tpu.memory_space<vmem>>, vector<1x7x7xf32>
    %15 = vector.shape_cast %14 : vector<1x7x7xf32> to vector<7x7xf32>
    %16 = vector.extract_strided_slice %4 {offsets = [0, 106], sizes = [7, 36], strides = [1, 1]} : vector<7x144xf32> to vector<7x36xf32>
    %cst_14 = arith.constant dense<0.000000e+00> : vector<7x36xf32>
    %17 = tpu.matmul %15, %16, %cst_14 {dimension_numbers = #tpu.dot_dimension_numbers<[1], [0], [0], [1], [0, 0, 1, 1], [], []>} : vector<7x7xf32>, vector<7x36xf32>, vector<7x36xf32> -> vector<7x36xf32>
    %18 = arith.addf %13, %17 : vector<7x36xf32>
    %c3 = arith.constant 3 : index
    %c0_15 = arith.constant 0 : index
    %c0_16 = arith.constant 0 : index
    %19 = vector.load %arg4[%c3, %c0_15, %c0_16] : memref<5x7x7xf32, #tpu.memory_space<vmem>>, vector<1x7x7xf32>
    %20 = vector.shape_cast %19 : vector<1x7x7xf32> to vector<7x7xf32>
    %21 = vector.extract_strided_slice %4 {offsets = [0, 107], sizes = [7, 36], strides = [1, 1]} : vector<7x144xf32> to vector<7x36xf32>
    %cst_17 = arith.constant dense<0.000000e+00> : vector<7x36xf32>
    %22 = tpu.matmul %20, %21, %cst_17 {dimension_numbers = #tpu.dot_dimension_numbers<[1], [0], [0], [1], [0, 0, 1, 1], [], []>} : vector<7x7xf32>, vector<7x36xf32>, vector<7x36xf32> -> vector<7x36xf32>
    %23 = arith.addf %18, %22 : vector<7x36xf32>
    %c4 = arith.constant 4 : index
    %c0_18 = arith.constant 0 : index
    %c0_19 = arith.constant 0 : index
    %24 = vector.load %arg4[%c4, %c0_18, %c0_19] : memref<5x7x7xf32, #tpu.memory_space<vmem>>, vector<1x7x7xf32>
    %25 = vector.shape_cast %24 : vector<1x7x7xf32> to vector<7x7xf32>
    %26 = vector.extract_strided_slice %4 {offsets = [0, 108], sizes = [7, 36], strides = [1, 1]} : vector<7x144xf32> to vector<7x36xf32>
    %cst_20 = arith.constant dense<0.000000e+00> : vector<7x36xf32>
    %27 = tpu.matmul %25, %26, %cst_20 {dimension_numbers = #tpu.dot_dimension_numbers<[1], [0], [0], [1], [0, 0, 1, 1], [], []>} : vector<7x7xf32>, vector<7x36xf32>, vector<7x36xf32> -> vector<7x36xf32>
    %28 = arith.addf %23, %27 : vector<7x36xf32>
    %c0_21 = arith.constant 0 : index
    %c0_22 = arith.constant 0 : index
    %29 = vector.load %arg5[%c0_21, %c0_22] : memref<7x1xf32, #tpu.memory_space<vmem>>, vector<7x1xf32>
    %30 = vector.broadcast %29 : vector<7x1xf32> to vector<7x36xf32>
    %31 = arith.addf %28, %30 : vector<7x36xf32>
    %c0_23 = arith.constant 0 : index
    %c0_24 = arith.constant 0 : index
    %32 = vector.load %arg11[%c0_23, %c0_24] : memref<7x36xf32, #tpu.memory_space<vmem>>, vector<7x36xf32>
    tpu.vector_store %arg11[%c0_23, %c0_24], %31 {strides = array<i32>} : memref<7x36xf32, #tpu.memory_space<vmem>>, vector<7x36xf32>,
    %c0_i32 = arith.constant 0 : i32
    %33 = arith.cmpi eq, %arg1, %c0_i32 : i32
    %34 = arith.extui %33 : i1 to i32
    %c0_i32_25 = arith.constant 0 : i32
    %35 = arith.cmpi ne, %34, %c0_i32_25 : i32
    scf.if %35 {
      %cst_63 = arith.constant 0.000000e+00 : f32
      %74 = vector.broadcast %cst_63 : f32 to vector<7x20xf32>
      %c0_64 = arith.constant 0 : index
      %c0_65 = arith.constant 0 : index
      %75 = vector.load %arg11[%c0_64, %c0_65] : memref<7x36xf32, #tpu.memory_space<vmem>>, vector<7x20xf32>
      tpu.vector_store %arg11[%c0_64, %c0_65], %74 {strides = array<i32>} : memref<7x36xf32, #tpu.memory_space<vmem>>, vector<7x20xf32>,
    } else {
    }
    %c0_26 = arith.constant 0 : index
    %c0_27 = arith.constant 0 : index
    %c0_28 = arith.constant 0 : index
    %36 = vector.load %arg6[%c0_26, %c0_27, %c0_28] : memref<5x7x7xf32, #tpu.memory_space<vmem>>, vector<1x7x7xf32>
    %37 = vector.shape_cast %36 : vector<1x7x7xf32> to vector<7x7xf32>
    %c0_29 = arith.constant 0 : index
    %c0_30 = arith.constant 0 : index
    %38 = vector.load %arg11[%c0_29, %c0_30] : memref<7x36xf32, #tpu.memory_space<vmem>>, vector<7x16xf32>
    %cst_31 = arith.constant dense<0.000000e+00> : vector<7x16xf32>
    %39 = tpu.matmul %37, %38, %cst_31 {dimension_numbers = #tpu.dot_dimension_numbers<[1], [0], [0], [1], [0, 0, 1, 1], [], []>} : vector<7x7xf32>, vector<7x16xf32>, vector<7x16xf32> -> vector<7x16xf32>
    %c1_32 = arith.constant 1 : index
    %c0_33 = arith.constant 0 : index
    %c0_34 = arith.constant 0 : index
    %40 = vector.load %arg6[%c1_32, %c0_33, %c0_34] : memref<5x7x7xf32, #tpu.memory_space<vmem>>, vector<1x7x7xf32>
    %41 = vector.shape_cast %40 : vector<1x7x7xf32> to vector<7x7xf32>
    %c0_35 = arith.constant 0 : index
    %c5 = arith.constant 5 : index
    %42 = vector.load %arg11[%c0_35, %c5] : memref<7x36xf32, #tpu.memory_space<vmem>>, vector<7x16xf32>
    %cst_36 = arith.constant dense<0.000000e+00> : vector<7x16xf32>
    %43 = tpu.matmul %41, %42, %cst_36 {dimension_numbers = #tpu.dot_dimension_numbers<[1], [0], [0], [1], [0, 0, 1, 1], [], []>} : vector<7x7xf32>, vector<7x16xf32>, vector<7x16xf32> -> vector<7x16xf32>
    %44 = arith.addf %39, %43 : vector<7x16xf32>
    %c2_37 = arith.constant 2 : index
    %c0_38 = arith.constant 0 : index
    %c0_39 = arith.constant 0 : index
    %45 = vector.load %arg6[%c2_37, %c0_38, %c0_39] : memref<5x7x7xf32, #tpu.memory_space<vmem>>, vector<1x7x7xf32>
    %46 = vector.shape_cast %45 : vector<1x7x7xf32> to vector<7x7xf32>
    %c0_40 = arith.constant 0 : index
    %c10 = arith.constant 10 : index
    %47 = vector.load %arg11[%c0_40, %c10] : memref<7x36xf32, #tpu.memory_space<vmem>>, vector<7x16xf32>
    %cst_41 = arith.constant dense<0.000000e+00> : vector<7x16xf32>
    %48 = tpu.matmul %46, %47, %cst_41 {dimension_numbers = #tpu.dot_dimension_numbers<[1], [0], [0], [1], [0, 0, 1, 1], [], []>} : vector<7x7xf32>, vector<7x16xf32>, vector<7x16xf32> -> vector<7x16xf32>
    %49 = arith.addf %44, %48 : vector<7x16xf32>
    %c3_42 = arith.constant 3 : index
    %c0_43 = arith.constant 0 : index
    %c0_44 = arith.constant 0 : index
    %50 = vector.load %arg6[%c3_42, %c0_43, %c0_44] : memref<5x7x7xf32, #tpu.memory_space<vmem>>, vector<1x7x7xf32>
    %51 = vector.shape_cast %50 : vector<1x7x7xf32> to vector<7x7xf32>
    %c0_45 = arith.constant 0 : index
    %c15 = arith.constant 15 : index
    %52 = vector.load %arg11[%c0_45, %c15] : memref<7x36xf32, #tpu.memory_space<vmem>>, vector<7x16xf32>
    %cst_46 = arith.constant dense<0.000000e+00> : vector<7x16xf32>
    %53 = tpu.matmul %51, %52, %cst_46 {dimension_numbers = #tpu.dot_dimension_numbers<[1], [0], [0], [1], [0, 0, 1, 1], [], []>} : vector<7x7xf32>, vector<7x16xf32>, vector<7x16xf32> -> vector<7x16xf32>
    %54 = arith.addf %49, %53 : vector<7x16xf32>
    %c4_47 = arith.constant 4 : index
    %c0_48 = arith.constant 0 : index
    %c0_49 = arith.constant 0 : index
    %55 = vector.load %arg6[%c4_47, %c0_48, %c0_49] : memref<5x7x7xf32, #tpu.memory_space<vmem>>, vector<1x7x7xf32>
    %56 = vector.shape_cast %55 : vector<1x7x7xf32> to vector<7x7xf32>
    %c0_50 = arith.constant 0 : index
    %c20 = arith.constant 20 : index
    %57 = vector.load %arg11[%c0_50, %c20] : memref<7x36xf32, #tpu.memory_space<vmem>>, vector<7x16xf32>
    %cst_51 = arith.constant dense<0.000000e+00> : vector<7x16xf32>
    %58 = tpu.matmul %56, %57, %cst_51 {dimension_numbers = #tpu.dot_dimension_numbers<[1], [0], [0], [1], [0, 0, 1, 1], [], []>} : vector<7x7xf32>, vector<7x16xf32>, vector<7x16xf32> -> vector<7x16xf32>
    %59 = arith.addf %54, %58 : vector<7x16xf32>
    %c0_52 = arith.constant 0 : index
    %c0_53 = arith.constant 0 : index
    %60 = vector.load %arg7[%c0_52, %c0_53] : memref<7x1xf32, #tpu.memory_space<vmem>>, vector<7x1xf32>
    %61 = vector.broadcast %60 : vector<7x1xf32> to vector<7x16xf32>
    %62 = arith.addf %59, %61 : vector<7x16xf32>
    %cst_54 = arith.constant 0.000000e+00 : f32
    %63 = vector.broadcast %cst_54 : f32 to vector<7x16xf32>
    %64 = arith.maximumf %62, %63 : vector<7x16xf32>
    %c0_55 = arith.constant 0 : index
    %c0_56 = arith.constant 0 : index
    %65 = vector.load %arg8[%c0_55, %c0_56] : memref<7x7xf32, #tpu.memory_space<vmem>>, vector<7x7xf32>
    %cst_57 = arith.constant dense<0.000000e+00> : vector<7x16xf32>
    %66 = tpu.matmul %65, %64, %cst_57 {dimension_numbers = #tpu.dot_dimension_numbers<[1], [0], [0], [1], [0, 0, 1, 1], [], []>} : vector<7x7xf32>, vector<7x16xf32>, vector<7x16xf32> -> vector<7x16xf32>
    %c0_58 = arith.constant 0 : index
    %c0_59 = arith.constant 0 : index
    %67 = vector.load %arg9[%c0_58, %c0_59] : memref<7x1xf32, #tpu.memory_space<vmem>>, vector<7x1xf32>
    %68 = vector.broadcast %67 : vector<7x1xf32> to vector<7x16xf32>
    %69 = arith.addf %66, %68 : vector<7x16xf32>
    %70 = arith.addf %1, %69 : vector<7x16xf32>
    %c0_60 = arith.constant 0 : index
    %c0_61 = arith.constant 0 : index
    %c0_62 = arith.constant 0 : index
    %71 = vector.load %arg10[%c0_60, %c0_61, %c0_62] : memref<1x7x16xf32, #tpu.memory_space<vmem>>, vector<1x7x16xf32>
    %72 = vector.shape_cast %71 : vector<1x7x16xf32> to vector<7x16xf32>
    %73 = vector.shape_cast %70 : vector<7x16xf32> to vector<1x7x16xf32>
    tpu.vector_store %arg10[%c0_60, %c0_61, %c0_62], %73 {strides = array<i32>} : memref<1x7x16xf32, #tpu.memory_space<vmem>>, vector<1x7x16xf32>,
    return
  }
  func.func @transform_0(%arg0: i32, %arg1: i32) -> (i32, i32, i32, i32) {
    %c0_i32 = arith.constant 0 : i32
    %c0_i32_0 = arith.constant 0 : i32
    %c0_i32_1 = arith.constant 0 : i32
    return %arg0, %arg1, %c0_i32, %c0_i32_0 : i32, i32, i32, i32
  }
  func.func @transform_1(%arg0: i32, %arg1: i32) -> (i32, i32, i32) {
    %c0_i32 = arith.constant 0 : i32
    %c0_i32_0 = arith.constant 0 : i32
    return %arg0, %c0_i32, %arg1 : i32, i32, i32
  }
  func.func @transform_2(%arg0: i32, %arg1: i32) -> (i32, i32, i32) {
    %c0_i32 = arith.constant 0 : i32
    %c0_i32_0 = arith.constant 0 : i32
    %c0_i32_1 = arith.constant 0 : i32
    %c0_i32_2 = arith.constant 0 : i32
    return %c0_i32, %c0_i32_0, %c0_i32_1 : i32, i32, i32
  }
  func.func @transform_3(%arg0: i32, %arg1: i32) -> (i32, i32) {
    %c0_i32 = arith.constant 0 : i32
    %c0_i32_0 = arith.constant 0 : i32
    %c0_i32_1 = arith.constant 0 : i32
    return %c0_i32, %c0_i32_0 : i32, i32
  }
  func.func @transform_4(%arg0: i32, %arg1: i32) -> (i32, i32, i32) {
    %c0_i32 = arith.constant 0 : i32
    %c0_i32_0 = arith.constant 0 : i32
    %c0_i32_1 = arith.constant 0 : i32
    %c0_i32_2 = arith.constant 0 : i32
    return %c0_i32, %c0_i32_0, %c0_i32_1 : i32, i32, i32
  }
  func.func @transform_5(%arg0: i32, %arg1: i32) -> (i32, i32) {
    %c0_i32 = arith.constant 0 : i32
    %c0_i32_0 = arith.constant 0 : i32
    %c0_i32_1 = arith.constant 0 : i32
    return %c0_i32, %c0_i32_0 : i32, i32
  }
  func.func @transform_6(%arg0: i32, %arg1: i32) -> (i32, i32) {
    %c0_i32 = arith.constant 0 : i32
    %c0_i32_0 = arith.constant 0 : i32
    %c0_i32_1 = arith.constant 0 : i32
    return %c0_i32, %c0_i32_0 : i32, i32
  }
  func.func @transform_7(%arg0: i32, %arg1: i32) -> (i32, i32) {
    %c0_i32 = arith.constant 0 : i32
    %c0_i32_0 = arith.constant 0 : i32
    %c0_i32_1 = arith.constant 0 : i32
    return %c0_i32, %c0_i32_0 : i32, i32
  }
  func.func @transform_8(%arg0: i32, %arg1: i32) -> (i32, i32, i32) {
    %c0_i32 = arith.constant 0 : i32
    %c0_i32_0 = arith.constant 0 : i32
    return %arg0, %c0_i32, %arg1 : i32, i32, i32
  }
}

</mosaic_0001>

<llo_original>
// kernel: tpu_custom_call.1
$region0: #{tpu_custom_call.1}
  #allocation0 [shape = 'u32[]', space=smem, size = 0x4, offset = 0x4, fixed_abs, tag = 'smem constant byte address 0x4 - core index']
  #allocation1 [shape = 'u32[144,128]{1,0:T(1,128)}', space=vmem, size = 0x12000, scoped, tag = 'internal scratch']
  #allocation2 [shape = 'f32[7,36]{1,0:T(8,128)}', space=vmem, size = 0x1000, scoped, tag = 'scratch operand']
  %s0 = inlined_call_operand.vmem [shape: f32[2,1,7,128], index: 0, kind: input, shape index: {}]
  %s1 = inlined_call_operand.vmem [shape: f32[2,7,16], index: 1, kind: input, shape index: {}]
  %s2 = inlined_call_operand.vmem [shape: f32[5,7,7], index: 2, kind: input, shape index: {}]
  %s3 = inlined_call_operand.vmem [shape: f32[7,1], index: 3, kind: input, shape index: {}]
  %s4 = inlined_call_operand.vmem [shape: f32[5,7,7], index: 4, kind: input, shape index: {}]
  %s5 = inlined_call_operand.vmem [shape: f32[7,1], index: 5, kind: input, shape index: {}]
  %s6 = inlined_call_operand.vmem [shape: f32[7,7], index: 6, kind: input, shape index: {}]
  %s7 = inlined_call_operand.vmem [shape: f32[7,1], index: 7, kind: input, shape index: {}]
  %s8 = inlined_call_operand.vmem [shape: f32[2,7,16], index: 8, kind: output, shape index: {}]
  %s9 = sld [smem:[#allocation0]]
  $region69: #{tpu_custom_call.1} parent=0
    _
  %s11 = ssub.s32 1, %s9
  %s12 = scalar_select 0, %s11, %s9
  loop: start=0, step=1, limit=4
  $region2: #{tpu_custom_call.1} parent=0 // loop_pre_header
    _
  $region3: #{tpu_custom_call.1} parent=0 // loop_header
    %s14 = sphi 0, %s18
    %p15 = scmp.ge.s32.totalorder %s14, 4
    %s21 = sphi 0, %s33
    %s22 = sphi 0, %s29
    %s23 = sphi 0, %s21
    %s24 = sphi 0, %s22
    %s25 = sphi 0, %s23
    %s26 = sphi 0, %s24
    %s38 = sphi 0, %s40
    %s41 = sphi 0, %s38
    %s42 = sphi 0, %s41
    %s58 = sphi 0, %s42
    %s66 = sphi 0, %s68
    %s69 = sphi 0, %s66
    %s70 = sphi 0, %s69
    %s86 = sphi 0, %s70
    %s90 = sphi 0, %s90
    %s92 = sphi 0, %s90
    %s93 = sphi 0, %s92
    %s107 = sphi 0, %s93
    %s111 = sphi 0, %s111
    %s113 = sphi 0, %s111
    %s114 = sphi 0, %s113
    %s128 = sphi 0, %s114
    %s132 = sphi 0, %s132
    %s134 = sphi 0, %s132
    %s135 = sphi 0, %s134
    %s149 = sphi 0, %s135
    %s153 = sphi 0, %s153
    %s155 = sphi 0, %s153
    %s156 = sphi 0, %s155
    %s170 = sphi 0, %s156
    %s174 = sphi 0, %s174
    %s176 = sphi 0, %s174
    %s177 = sphi 0, %s176
    %s191 = sphi 0, %s177
    %s195 = sphi 0, %s195
    %s197 = sphi 0, %s195
    %s198 = sphi 0, %s197
    %s212 = sphi 0, %s198
    %s220 = sphi 0, %s222
    %s223 = sphi 0, %s220
    %s224 = sphi 0, %s223
    %s240 = sphi 0, %s224
  $region4: #{tpu_custom_call.1} parent=0 // loop_header_branch
    %17 = sbr.rel (%p15) target = $region8
  $region5: #{tpu_custom_call.1} parent=0 // loop_body
    %s19 = ssub.s32 %s14, 1
    %s20 = ssub.s32 %s14, 2
    %s27 = sadd.s32 1, %s22
    %p28 = scmp.ge.s32.totalorder %s27, 1
    %s29 = scalar_select %p28, 0, %s27
    %s30 = sadd.s32 1, %s21
    %s31 = scalar_select %p28, %s30, %s21
    %p32 = scmp.ge.s32.totalorder %s31, 2
    %s33 = scalar_select %p32, 0, %s31
    %s34 = ssub.s32 %s21, %s33
    %s35 = ssub.s32 %s22, %s29
    %s36 = sor.u32 %s34, %s35
    %p37 = scmp.eq.s32.totalorder %s36, 0
    %s39 = sadd.s32 %s38, 1
    %s40 = scalar_select %p37, %s38, %s39
    %p43 = pneg %p37
    %p44 = scmp.eq.s32.totalorder %s14, 1
    %p45 = por %p43, %p44
    %p46 = scmp.ne.s32.totalorder %s38, %s41
    %p47 = scmp.eq.s32.totalorder %s14, 0
    %p48 = por %p46, %p47
    %p49 = scmp.ne.s32.totalorder %s38, %s41
    %p50 = scmp.eq.s32.totalorder %s19, 1
    %p51 = por %p49, %p50
    %p52 = scmp.ne.s32.totalorder %s41, %s42
    %p53 = scmp.eq.s32.totalorder %s19, 0
    %p54 = por %p52, %p53
    %p55 = scmp.ne.s32.totalorder %s41, %s42
    %p56 = scmp.eq.s32.totalorder %s20, 1
    %p57 = por %p55, %p56
    %p59 = scmp.ne.s32.totalorder %s42, %s58
    %p60 = scmp.eq.s32.totalorder %s20, 0
    %p61 = por %p59, %p60
    %s62 = ssub.s32 %s21, %s33
    %s63 = ssub.s32 %s22, %s29
    %s64 = sor.u32 %s62, %s63
    %p65 = scmp.eq.s32.totalorder %s64, 0
    %s67 = sadd.s32 %s66, 1
    %s68 = scalar_select %p65, %s66, %s67
    %p71 = pneg %p65
    %p72 = scmp.eq.s32.totalorder %s14, 1
    %p73 = por %p71, %p72
    %p74 = scmp.ne.s32.totalorder %s66, %s69
    %p75 = scmp.eq.s32.totalorder %s14, 0
    %p76 = por %p74, %p75
    %p77 = scmp.ne.s32.totalorder %s66, %s69
    %p78 = scmp.eq.s32.totalorder %s19, 1
    %p79 = por %p77, %p78
    %p80 = scmp.ne.s32.totalorder %s69, %s70
    %p81 = scmp.eq.s32.totalorder %s19, 0
    %p82 = por %p80, %p81
    %p83 = scmp.ne.s32.totalorder %s69, %s70
    %p84 = scmp.eq.s32.totalorder %s20, 1
    %p85 = por %p83, %p84
    %p87 = scmp.ne.s32.totalorder %s70, %s86
    %p88 = scmp.eq.s32.totalorder %s20, 0
    %p89 = por %p87, %p88
    %s91 = sadd.s32 %s90, 1
    %p94 = scmp.eq.s32.totalorder %s14, 1
    %p95 = scmp.ne.s32.totalorder %s90, %s92
    %p96 = scmp.eq.s32.totalorder %s14, 0
    %p97 = por %p95, %p96
    %p98 = scmp.ne.s32.totalorder %s90, %s92
    %p99 = scmp.eq.s32.totalorder %s19, 1
    %p100 = por %p98, %p99
    %p101 = scmp.ne.s32.totalorder %s92, %s93
    %p102 = scmp.eq.s32.totalorder %s19, 0
    %p103 = por %p101, %p102
    %p104 = scmp.ne.s32.totalorder %s92, %s93
    %p105 = scmp.eq.s32.totalorder %s20, 1
    %p106 = por %p104, %p105
    %p108 = scmp.ne.s32.totalorder %s93, %s107
    %p109 = scmp.eq.s32.totalorder %s20, 0
    %p110 = por %p108, %p109
    %s112 = sadd.s32 %s111, 1
    %p115 = scmp.eq.s32.totalorder %s14, 1
    %p116 = scmp.ne.s32.totalorder %s111, %s113
    %p117 = scmp.eq.s32.totalorder %s14, 0
    %p118 = por %p116, %p117
    %p119 = scmp.ne.s32.totalorder %s111, %s113
    %p120 = scmp.eq.s32.totalorder %s19, 1
    %p121 = por %p119, %p120
    %p122 = scmp.ne.s32.totalorder %s113, %s114
    %p123 = scmp.eq.s32.totalorder %s19, 0
    %p124 = por %p122, %p123
    %p125 = scmp.ne.s32.totalorder %s113, %s114
    %p126 = scmp.eq.s32.totalorder %s20, 1
    %p127 = por %p125, %p126
    %p129 = scmp.ne.s32.totalorder %s114, %s128
    %p130 = scmp.eq.s32.totalorder %s20, 0
    %p131 = por %p129, %p130
    %s133 = sadd.s32 %s132, 1
    %p136 = scmp.eq.s32.totalorder %s14, 1
    %p137 = scmp.ne.s32.totalorder %s132, %s134
    %p138 = scmp.eq.s32.totalorder %s14, 0
    %p139 = por %p137, %p138
    %p140 = scmp.ne.s32.totalorder %s132, %s134
    %p141 = scmp.eq.s32.totalorder %s19, 1
    %p142 = por %p140, %p141
    %p143 = scmp.ne.s32.totalorder %s134, %s135
    %p144 = scmp.eq.s32.totalorder %s19, 0
    %p145 = por %p143, %p144
    %p146 = scmp.ne.s32.totalorder %s134, %s135
    %p147 = scmp.eq.s32.totalorder %s20, 1
    %p148 = por %p146, %p147
    %p150 = scmp.ne.s32.totalorder %s135, %s149
    %p151 = scmp.eq.s32.totalorder %s20, 0
    %p152 = por %p150, %p151
    %s154 = sadd.s32 %s153, 1
    %p157 = scmp.eq.s32.totalorder %s14, 1
    %p158 = scmp.ne.s32.totalorder %s153, %s155
    %p159 = scmp.eq.s32.totalorder %s14, 0
    %p160 = por %p158, %p159
    %p161 = scmp.ne.s32.totalorder %s153, %s155
    %p162 = scmp.eq.s32.totalorder %s19, 1
    %p163 = por %p161, %p162
    %p164 = scmp.ne.s32.totalorder %s155, %s156
    %p165 = scmp.eq.s32.totalorder %s19, 0
    %p166 = por %p164, %p165
    %p167 = scmp.ne.s32.totalorder %s155, %s156
    %p168 = scmp.eq.s32.totalorder %s20, 1
    %p169 = por %p167, %p168
    %p171 = scmp.ne.s32.totalorder %s156, %s170
    %p172 = scmp.eq.s32.totalorder %s20, 0
    %p173 = por %p171, %p172
    %s175 = sadd.s32 %s174, 1
    %p178 = scmp.eq.s32.totalorder %s14, 1
    %p179 = scmp.ne.s32.totalorder %s174, %s176
    %p180 = scmp.eq.s32.totalorder %s14, 0
    %p181 = por %p179, %p180
    %p182 = scmp.ne.s32.totalorder %s174, %s176
    %p183 = scmp.eq.s32.totalorder %s19, 1
    %p184 = por %p182, %p183
    %p185 = scmp.ne.s32.totalorder %s176, %s177
    %p186 = scmp.eq.s32.totalorder %s19, 0
    %p187 = por %p185, %p186
    %p188 = scmp.ne.s32.totalorder %s176, %s177
    %p189 = scmp.eq.s32.totalorder %s20, 1
    %p190 = por %p188, %p189
    %p192 = scmp.ne.s32.totalorder %s177, %s191
    %p193 = scmp.eq.s32.totalorder %s20, 0
    %p194 = por %p192, %p193
    %s196 = sadd.s32 %s195, 1
    %p199 = scmp.eq.s32.totalorder %s14, 1
    %p200 = scmp.ne.s32.totalorder %s195, %s197
    %p201 = scmp.eq.s32.totalorder %s14, 0
    %p202 = por %p200, %p201
    %p203 = scmp.ne.s32.totalorder %s195, %s197
    %p204 = scmp.eq.s32.totalorder %s19, 1
    %p205 = por %p203, %p204
    %p206 = scmp.ne.s32.totalorder %s197, %s198
    %p207 = scmp.eq.s32.totalorder %s19, 0
    %p208 = por %p206, %p207
    %p209 = scmp.ne.s32.totalorder %s197, %s198
    %p210 = scmp.eq.s32.totalorder %s20, 1
    %p211 = por %p209, %p210
    %p213 = scmp.ne.s32.totalorder %s198, %s212
    %p214 = scmp.eq.s32.totalorder %s20, 0
    %p215 = por %p213, %p214
    %s216 = ssub.s32 %s21, %s33
    %s217 = ssub.s32 %s22, %s29
    %s218 = sor.u32 %s216, %s217
    %p219 = scmp.eq.s32.totalorder %s218, 0
    %s221 = sadd.s32 %s220, 1
    %s222 = scalar_select %p219, %s220, %s221
    %p225 = pneg %p219
    %p226 = scmp.eq.s32.totalorder %s14, 1
    %p227 = por %p225, %p226
    %p228 = scmp.ne.s32.totalorder %s220, %s223
    %p229 = scmp.eq.s32.totalorder %s14, 0
    %p230 = por %p228, %p229
    %p231 = scmp.ne.s32.totalorder %s220, %s223
    %p232 = scmp.eq.s32.totalorder %s19, 1
    %p233 = por %p231, %p232
    %p234 = scmp.ne.s32.totalorder %s223, %s224
    %p235 = scmp.eq.s32.totalorder %s19, 0
    %p236 = por %p234, %p235
    %p237 = scmp.ne.s32.totalorder %s223, %s224
    %p238 = scmp.eq.s32.totalorder %s20, 1
    %p239 = por %p237, %p238
    %p241 = scmp.ne.s32.totalorder %s224, %s240
    %p242 = scmp.eq.s32.totalorder %s20, 0
    %p243 = por %p241, %p242
    %p244 = scmp.le.s32.totalorder 1, %s14
    %p245 = scmp.lt.s32.totalorder %s14, 3
    %p246 = pnand %p244, %p245
    %p247 = pneg %p246
    // Predicated region
    $region9: #{tpu_custom_call.1} parent=5 // pred_check
      _
    $region10: #{tpu_custom_call.1} parent=5 // pred_check_branch
      %249 = sbr.rel (%p246) target = $region12
    $region11: #{tpu_custom_call.1} parent=5 // pred_region
      %s250 = ssub.s32 %s14, 1
      // Predicated region
      $region13: #{tpu_custom_call.1} parent=11 // pred_check
        %p251 = pneg %p103
      $region14: #{tpu_custom_call.1} parent=11 // pred_check_branch
        %253 = sbr.rel (%p251) target = $region16
      $region15: #{tpu_custom_call.1} parent=11 // pred_region
        _
      $region16: #{tpu_custom_call.1} parent=11 // pred_fallthru
        _
      // Predicated region
      $region17: #{tpu_custom_call.1} parent=11 // pred_check
        %p254 = pneg %p124
      $region18: #{tpu_custom_call.1} parent=11 // pred_check_branch
        %256 = sbr.rel (%p254) target = $region20
      $region19: #{tpu_custom_call.1} parent=11 // pred_region
        _
      $region20: #{tpu_custom_call.1} parent=11 // pred_fallthru
        _
      // Predicated region
      $region21: #{tpu_custom_call.1} parent=11 // pred_check
        %p257 = pneg %p145
      $region22: #{tpu_custom_call.1} parent=11 // pred_check_branch
        %259 = sbr.rel (%p257) target = $region24
      $region23: #{tpu_custom_call.1} parent=11 // pred_region
        _
      $region24: #{tpu_custom_call.1} parent=11 // pred_fallthru
        _
      // Predicated region
      $region25: #{tpu_custom_call.1} parent=11 // pred_check
        %p260 = pneg %p166
      $region26: #{tpu_custom_call.1} parent=11 // pred_check_branch
        %262 = sbr.rel (%p260) target = $region28
      $region27: #{tpu_custom_call.1} parent=11 // pred_region
        _
      $region28: #{tpu_custom_call.1} parent=11 // pred_fallthru
        _
      // Predicated region
      $region29: #{tpu_custom_call.1} parent=11 // pred_check
        %p263 = pneg %p187
      $region30: #{tpu_custom_call.1} parent=11 // pred_check_branch
        %265 = sbr.rel (%p263) target = $region32
      $region31: #{tpu_custom_call.1} parent=11 // pred_region
        _
      $region32: #{tpu_custom_call.1} parent=11 // pred_fallthru
        _
      // Predicated region
      $region33: #{tpu_custom_call.1} parent=11 // pred_check
        %p266 = pneg %p208
      $region34: #{tpu_custom_call.1} parent=11 // pred_check_branch
        %268 = sbr.rel (%p266) target = $region36
      $region35: #{tpu_custom_call.1} parent=11 // pred_region
        _
      $region36: #{tpu_custom_call.1} parent=11 // pred_fallthru
        _
    $region12: #{tpu_custom_call.1} parent=5 // pred_fallthru
      _
    %p269 = scmp.lt.s32.totalorder %s14, 2
    // Predicated region
    $region37: #{tpu_custom_call.1} parent=5 // pred_check
      %p270 = pneg %p269
    $region38: #{tpu_custom_call.1} parent=5 // pred_check_branch
      %272 = sbr.rel (%p270) target = $region40
    $region39: #{tpu_custom_call.1} parent=5 // pred_region
      // Predicated region
      $region41: #{tpu_custom_call.1} parent=39 // pred_check
        %p273 = pneg %p48
      $region42: #{tpu_custom_call.1} parent=39 // pred_check_branch
        %275 = sbr.rel (%p273) target = $region44
      $region43: #{tpu_custom_call.1} parent=39 // pred_region
        %p276 = scmp.lt.s32.totalorder %s21, 1
        %s277 = scalar_select %p276, %s21, 1
        %p278 = scmp.lt.s32.totalorder %s22, 0
        %s279 = scalar_select %p278, %s22, 0
        %s280 = sadd.s32 %s279, %s277
        %s281 = smul.addr %s280, 8
        %s282 = scalar_lea.vmem %s0, %s281
      $region44: #{tpu_custom_call.1} parent=39 // pred_fallthru
        _
      // Predicated region
      $region45: #{tpu_custom_call.1} parent=39 // pred_check
        %p283 = pneg %p76
      $region46: #{tpu_custom_call.1} parent=39 // pred_check_branch
        %285 = sbr.rel (%p283) target = $region48
      $region47: #{tpu_custom_call.1} parent=39 // pred_region
        %p286 = scmp.lt.s32.totalorder %s21, 1
        %s287 = scalar_select %p286, %s21, 1
        %p288 = scmp.lt.s32.totalorder %s22, 0
        %s289 = scalar_select %p288, %s22, 0
        %s290 = sadd.s32 %s289, %s287
        %s291 = smul.addr %s290, 8
        %s292 = scalar_lea.vmem %s1, %s291
      $region48: #{tpu_custom_call.1} parent=39 // pred_fallthru
        _
    $region40: #{tpu_custom_call.1} parent=5 // pred_fallthru
      _
    %p293 = scmp.le.s32.totalorder 1, %s14
    %p294 = scmp.lt.s32.totalorder %s14, 3
    %p295 = pnand %p293, %p294
    %p296 = pneg %p295
    // Predicated region
    $region49: #{tpu_custom_call.1} parent=5 // pred_check
      _
    $region50: #{tpu_custom_call.1} parent=5 // pred_check_branch
      %298 = sbr.rel (%p295) target = $region52
    $region51: #{tpu_custom_call.1} parent=5 // pred_region
      %s299 = ssub.s32 %s14, 1
      %p300 = scmp.lt.s32.totalorder %s23, 1
      %s301 = scalar_select %p300, %s23, 1
      %p302 = scmp.lt.s32.totalorder %s24, 0
      %s303 = scalar_select %p302, %s24, 0
      %s304 = sadd.s32 %s303, %s301
      %s305 = smul.addr %s304, 8
      %s306 = scalar_lea.vmem %s0, %s305
      %p307 = pneg %p54
      %p308 = pneg %p51
      %p309 = scmp.lt.s32.totalorder %s23, 1
      %s310 = scalar_select %p309, %s23, 1
      %p311 = scmp.lt.s32.totalorder %s24, 0
      %s312 = scalar_select %p311, %s24, 0
      %s313 = sadd.s32 %s312, %s310
      %s314 = smul.addr %s313, 8
      %s315 = scalar_lea.vmem %s1, %s314
      %p316 = pneg %p82
      %p317 = pneg %p79
      %p318 = pneg %p103
      %p319 = pneg %p100
      %p320 = pneg %p124
      %p321 = pneg %p121
      %p322 = pneg %p145
      %p323 = pneg %p142
      %p324 = pneg %p166
      %p325 = pneg %p163
      %p326 = pneg %p187
      %p327 = pneg %p184
      %p328 = pneg %p208
      %p329 = pneg %p205
      %p330 = pneg %p236
      %p331 = pneg %p233
      %p332 = scmp.lt.s32.totalorder %s23, 1
      %s333 = scalar_select %p332, %s23, 1
      %p334 = scmp.lt.s32.totalorder %s24, 0
      %s335 = scalar_select %p334, %s24, 0
      %s336 = sadd.s32 %s335, %s333
      %s337 = smul.addr %s336, 8
      %s338 = scalar_lea.vmem %s8, %s337
      %p339 = scmp.lt.s32.totalorder %s23, 1
      %s340 = scalar_select %p339, %s23, 1
      %p341 = scmp.lt.s32.totalorder %s24, 0
      %s342 = scalar_select %p341, %s24, 0
      %s343 = sadd.s32 %s342, %s340
      %s344 = smul.addr %s343, 8
      %s345 = scalar_lea.vmem %s0, %s344
      %p346 = scmp.lt.s32.totalorder %s23, 1
      %s347 = scalar_select %p346, %s23, 1
      %p348 = scmp.lt.s32.totalorder %s24, 0
      %s349 = scalar_select %p348, %s24, 0
      %s350 = sadd.s32 %s349, %s347
      %s351 = smul.addr %s350, 8
      %s352 = scalar_lea.vmem %s1, %s351
      %p353 = scmp.lt.s32.totalorder %s23, 1
      %s354 = scalar_select %p353, %s23, 1
      %p355 = scmp.lt.s32.totalorder %s24, 0
      %s356 = scalar_select %p355, %s24, 0
      %s357 = sadd.s32 %s356, %s354
      %s358 = smul.addr %s357, 8
      %s359 = scalar_lea.vmem %s8, %s358
      %v360 = vld [vmem:[%s352] sm:$0x7f]
      %v361 = vld [vmem:[%s345] sm:$0x7f]
      %v362 = vld [vmem:[%s2] sm:$0x7f]
      %s363 = scalar_lea.vmem %s2, 8
      %v364 = vld [vmem:[%s363] sm:$0x7f]
      %367 = vrot.lane.b32.xlu0 %v361, 23
      %v368 = vpop.permute.xlu0 %367
      %369 = vrot.lane.b32.xlu0 %v360, 23
      %v370 = vpop.permute.xlu0 %369
      %vm371 = vcmask 187392
      %v372 = vsel %vm371, %v368, %v370
      %vm373 = vcmask 56320
      %v375 = vsel %vm373, %v364, 0
      %vm377 = vcmask 1046528
      %v378 = vsel %vm377, %v372, 0
      %380 = vmatprep.subr.mxu0 0.0
      %381 = vmatpush1.msra.mxu0 0.0
      %382 = vmatprep.subr.mxu0 0.0
      %383 = vmatpush1.msra.mxu0 0.0
      %384 = vmatprep.subr.mxu0 0.0
      %385 = vmatpush1.msra.mxu0 0.0
      %386 = vmatprep.subr.mxu0 0.0
      %387 = vmatpush1.msra.mxu0 0.0
      %388 = vmatprep.subr.mxu0 0.0
      %389 = vmatpush1.msra.mxu0 0.0
      %390 = vmatprep.subr.mxu0 0.0
      %391 = vmatpush1.msra.mxu0 0.0
      %392 = vmatprep.subr.mxu0 0.0
      %393 = vmatpush1.msra.mxu0 0.0
      %394 = vmatprep.subr.mxu0 0.0
      %395 = vmatpush1.msra.mxu0 0.0
      %396 = vmatprep.subr.mxu0 0.0
      %397 = vmatpush1.msra.mxu0 0.0
      %398 = vmatprep.subr.mxu0 0.0
      %399 = vmatpush1.msra.mxu0 0.0
      %400 = vmatprep.subr.mxu0 0.0
      %401 = vmatpush1.msra.mxu0 0.0
      %402 = vmatprep.subr.mxu0 0.0
      %403 = vmatpush1.msra.mxu0 0.0
      %404 = vmatprep.subr.mxu0 0.0
      %405 = vmatpush1.msra.mxu0 0.0
      %406 = vmatprep.subr.mxu0 0.0
      %407 = vmatpush1.msra.mxu0 0.0
      %408 = vmatprep.subr.mxu0 0.0
      %409 = vmatpush1.msra.mxu0 0.0
      %410 = vmatprep.subr.mxu0 0.0
      %411 = vmatpush1.msra.mxu0 %v378
      %412 = vmatprep.subr.mxu0 0.0
      %413 = vmatpush2.msra.mxu0 0.0
      %414 = vmatprep.subr.mxu0 0.0
      %415 = vmatpush2.msra.mxu0 0.0
      %416 = vmatprep.subr.mxu0 0.0
      %417 = vmatpush2.msra.mxu0 0.0
      %418 = vmatprep.subr.mxu0 0.0
      %419 = vmatpush2.msra.mxu0 0.0
      %420 = vmatprep.subr.mxu0 0.0
      %421 = vmatpush2.msra.mxu0 0.0
      %422 = vmatprep.subr.mxu0 0.0
      %423 = vmatpush2.msra.mxu0 0.0
      %424 = vmatprep.subr.mxu0 0.0
      %425 = vmatpush2.msra.mxu0 0.0
      %426 = vmatprep.subr.mxu0 0.0
      %427 = vmatpush2.msra.mxu0 0.0
      %428 = vmatprep.subr.mxu0 0.0
      %429 = vmatpush2.msra.mxu0 0.0
      %430 = vmatprep.subr.mxu0 0.0
      %431 = vmatpush2.msra.mxu0 0.0
      %432 = vmatprep.subr.mxu0 0.0
      %433 = vmatpush2.msra.mxu0 0.0
      %434 = vmatprep.subr.mxu0 0.0
      %435 = vmatpush2.msra.mxu0 0.0
      %436 = vmatprep.subr.mxu0 0.0
      %437 = vmatpush2.msra.mxu0 0.0
      %438 = vmatprep.subr.mxu0 0.0
      %439 = vmatpush2.msra.mxu0 0.0
      %440 = vmatprep.subr.mxu0 0.0
      %441 = vmatpush2.msra.mxu0 0.0
      %442 = vmatprep.subr.mxu0 0.0
      %443 = vmatpush2.msra.mxu0 0.0
      %444 = vmatprep.mubr.f32.mxu0 0.0
      %445 = vmatmul.mubr.f32.gmra.mxu0 %v375
      %v446 = vpop.f32.mrf.mxu0
      %v447 = vadd.f32 0.0, %v446
      %v448 = vpop.f32.mrf.mxu0
      %449 = vdwg.mxu0
      %450 = vrot.lane.b32.xlu0 %v361, 24
      %v451 = vpop.permute.xlu0 %450
      %452 = vrot.lane.b32.xlu0 %v360, 24
      %v453 = vpop.permute.xlu0 %452
      %vm454 = vcmask 195584
      %v455 = vsel %vm454, %v451, %v453
      %v457 = vsel %vm373, %v362, 0
      %v459 = vsel %vm377, %v455, 0
      %461 = vmatprep.subr.mxu0 0.0
      %462 = vmatpush1.msra.mxu0 0.0
      %463 = vmatprep.subr.mxu0 0.0
      %464 = vmatpush1.msra.mxu0 0.0
      %465 = vmatprep.subr.mxu0 0.0
      %466 = vmatpush1.msra.mxu0 0.0
      %467 = vmatprep.subr.mxu0 0.0
      %468 = vmatpush1.msra.mxu0 0.0
      %469 = vmatprep.subr.mxu0 0.0
      %470 = vmatpush1.msra.mxu0 0.0
      %471 = vmatprep.subr.mxu0 0.0
      %472 = vmatpush1.msra.mxu0 0.0
      %473 = vmatprep.subr.mxu0 0.0
      %474 = vmatpush1.msra.mxu0 0.0
      %475 = vmatprep.subr.mxu0 0.0
      %476 = vmatpush1.msra.mxu0 0.0
      %477 = vmatprep.subr.mxu0 0.0
      %478 = vmatpush1.msra.mxu0 0.0
      %479 = vmatprep.subr.mxu0 0.0
      %480 = vmatpush1.msra.mxu0 0.0
      %481 = vmatprep.subr.mxu0 0.0
      %482 = vmatpush1.msra.mxu0 0.0
      %483 = vmatprep.subr.mxu0 0.0
      %484 = vmatpush1.msra.mxu0 0.0
      %485 = vmatprep.subr.mxu0 0.0
      %486 = vmatpush1.msra.mxu0 0.0
      %487 = vmatprep.subr.mxu0 0.0
      %488 = vmatpush1.msra.mxu0 0.0
      %489 = vmatprep.subr.mxu0 0.0
      %490 = vmatpush1.msra.mxu0 0.0
      %491 = vmatprep.subr.mxu0 0.0
      %492 = vmatpush1.msra.mxu0 %v459
      %493 = vmatprep.subr.mxu0 0.0
      %494 = vmatpush2.msra.mxu0 0.0
      %495 = vmatprep.subr.mxu0 0.0
      %496 = vmatpush2.msra.mxu0 0.0
      %497 = vmatprep.subr.mxu0 0.0
      %498 = vmatpush2.msra.mxu0 0.0
      %499 = vmatprep.subr.mxu0 0.0
      %500 = vmatpush2.msra.mxu0 0.0
      %501 = vmatprep.subr.mxu0 0.0
      %502 = vmatpush2.msra.mxu0 0.0
      %503 = vmatprep.subr.mxu0 0.0
      %504 = vmatpush2.msra.mxu0 0.0
      %505 = vmatprep.subr.mxu0 0.0
      %506 = vmatpush2.msra.mxu0 0.0
      %507 = vmatprep.subr.mxu0 0.0
      %508 = vmatpush2.msra.mxu0 0.0
      %509 = vmatprep.subr.mxu0 0.0
      %510 = vmatpush2.msra.mxu0 0.0
      %511 = vmatprep.subr.mxu0 0.0
      %512 = vmatpush2.msra.mxu0 0.0
      %513 = vmatprep.subr.mxu0 0.0
      %514 = vmatpush2.msra.mxu0 0.0
      %515 = vmatprep.subr.mxu0 0.0
      %516 = vmatpush2.msra.mxu0 0.0
      %517 = vmatprep.subr.mxu0 0.0
      %518 = vmatpush2.msra.mxu0 0.0
      %519 = vmatprep.subr.mxu0 0.0
      %520 = vmatpush2.msra.mxu0 0.0
      %521 = vmatprep.subr.mxu0 0.0
      %522 = vmatpush2.msra.mxu0 0.0
      %523 = vmatprep.subr.mxu0 0.0
      %524 = vmatpush2.msra.mxu0 0.0
      %525 = vmatprep.mubr.f32.mxu0 0.0
      %526 = vmatmul.mubr.f32.gmra.mxu0 %v457
      %v527 = vpop.f32.mrf.mxu0
      %v528 = vadd.f32 %v447, %v527
      %v529 = vpop.f32.mrf.mxu0
      %530 = vdwg.mxu0
      %s531 = scalar_lea.vmem %s2, 16
      %v532 = vld [vmem:[%s531] sm:$0x7f]
      %533 = vrot.lane.b32.xlu0 %v361, 22
      %v534 = vpop.permute.xlu0 %533
      %535 = vrot.lane.b32.xlu0 %v360, 22
      %v536 = vpop.permute.xlu0 %535
      %vm537 = vcmask 179200
      %v538 = vsel %vm537, %v534, %v536
      %v540 = vsel %vm373, %v532, 0
      %v542 = vsel %vm377, %v538, 0
      %544 = vmatprep.subr.mxu0 0.0
      %545 = vmatpush1.msra.mxu0 0.0
      %546 = vmatprep.subr.mxu0 0.0
      %547 = vmatpush1.msra.mxu0 0.0
      %548 = vmatprep.subr.mxu0 0.0
      %549 = vmatpush1.msra.mxu0 0.0
      %550 = vmatprep.subr.mxu0 0.0
      %551 = vmatpush1.msra.mxu0 0.0
      %552 = vmatprep.subr.mxu0 0.0
      %553 = vmatpush1.msra.mxu0 0.0
      %554 = vmatprep.subr.mxu0 0.0
      %555 = vmatpush1.msra.mxu0 0.0
      %556 = vmatprep.subr.mxu0 0.0
      %557 = vmatpush1.msra.mxu0 0.0
      %558 = vmatprep.subr.mxu0 0.0
      %559 = vmatpush1.msra.mxu0 0.0
      %560 = vmatprep.subr.mxu0 0.0
      %561 = vmatpush1.msra.mxu0 0.0
      %562 = vmatprep.subr.mxu0 0.0
      %563 = vmatpush1.msra.mxu0 0.0
      %564 = vmatprep.subr.mxu0 0.0
      %565 = vmatpush1.msra.mxu0 0.0
      %566 = vmatprep.subr.mxu0 0.0
      %567 = vmatpush1.msra.mxu0 0.0
      %568 = vmatprep.subr.mxu0 0.0
      %569 = vmatpush1.msra.mxu0 0.0
      %570 = vmatprep.subr.mxu0 0.0
      %571 = vmatpush1.msra.mxu0 0.0
      %572 = vmatprep.subr.mxu0 0.0
      %573 = vmatpush1.msra.mxu0 0.0
      %574 = vmatprep.subr.mxu0 0.0
      %575 = vmatpush1.msra.mxu0 %v542
      %576 = vmatprep.subr.mxu0 0.0
      %577 = vmatpush2.msra.mxu0 0.0
      %578 = vmatprep.subr.mxu0 0.0
      %579 = vmatpush2.msra.mxu0 0.0
      %580 = vmatprep.subr.mxu0 0.0
      %581 = vmatpush2.msra.mxu0 0.0
      %582 = vmatprep.subr.mxu0 0.0
      %583 = vmatpush2.msra.mxu0 0.0
      %584 = vmatprep.subr.mxu0 0.0
      %585 = vmatpush2.msra.mxu0 0.0
      %586 = vmatprep.subr.mxu0 0.0
      %587 = vmatpush2.msra.mxu0 0.0
      %588 = vmatprep.subr.mxu0 0.0
      %589 = vmatpush2.msra.mxu0 0.0
      %590 = vmatprep.subr.mxu0 0.0
      %591 = vmatpush2.msra.mxu0 0.0
      %592 = vmatprep.subr.mxu0 0.0
      %593 = vmatpush2.msra.mxu0 0.0
      %594 = vmatprep.subr.mxu0 0.0
      %595 = vmatpush2.msra.mxu0 0.0
      %596 = vmatprep.subr.mxu0 0.0
      %597 = vmatpush2.msra.mxu0 0.0
      %598 = vmatprep.subr.mxu0 0.0
      %599 = vmatpush2.msra.mxu0 0.0
      %600 = vmatprep.subr.mxu0 0.0
      %601 = vmatpush2.msra.mxu0 0.0
      %602 = vmatprep.subr.mxu0 0.0
      %603 = vmatpush2.msra.mxu0 0.0
      %604 = vmatprep.subr.mxu0 0.0
      %605 = vmatpush2.msra.mxu0 0.0
      %606 = vmatprep.subr.mxu0 0.0
      %607 = vmatpush2.msra.mxu0 0.0
      %608 = vmatprep.mubr.f32.mxu0 0.0
      %609 = vmatmul.mubr.f32.gmra.mxu0 %v540
      %v610 = vpop.f32.mrf.mxu0
      %v611 = vadd.f32 0.0, %v610
      %v612 = vpop.f32.mrf.mxu0
      %613 = vdwg.mxu0
      %v614 = vadd.f32 %v528, %v611
      %s615 = scalar_lea.vmem %s2, 24
      %v616 = vld [vmem:[%s615] sm:$0x7f]
      %617 = vrot.lane.b32.xlu0 %v361, 21
      %v618 = vpop.permute.xlu0 %617
      %619 = vrot.lane.b32.xlu0 %v360, 21
      %v620 = vpop.permute.xlu0 %619
      %vm621 = vcmask 171008
      %v622 = vsel %vm621, %v618, %v620
      %v624 = vsel %vm373, %v616, 0
      %v626 = vsel %vm377, %v622, 0
      %628 = vmatprep.subr.mxu0 0.0
      %629 = vmatpush1.msra.mxu0 0.0
      %630 = vmatprep.subr.mxu0 0.0
      %631 = vmatpush1.msra.mxu0 0.0
      %632 = vmatprep.subr.mxu0 0.0
      %633 = vmatpush1.msra.mxu0 0.0
      %634 = vmatprep.subr.mxu0 0.0
      %635 = vmatpush1.msra.mxu0 0.0
      %636 = vmatprep.subr.mxu0 0.0
      %637 = vmatpush1.msra.mxu0 0.0
      %638 = vmatprep.subr.mxu0 0.0
      %639 = vmatpush1.msra.mxu0 0.0
      %640 = vmatprep.subr.mxu0 0.0
      %641 = vmatpush1.msra.mxu0 0.0
      %642 = vmatprep.subr.mxu0 0.0
      %643 = vmatpush1.msra.mxu0 0.0
      %644 = vmatprep.subr.mxu0 0.0
      %645 = vmatpush1.msra.mxu0 0.0
      %646 = vmatprep.subr.mxu0 0.0
      %647 = vmatpush1.msra.mxu0 0.0
      %648 = vmatprep.subr.mxu0 0.0
      %649 = vmatpush1.msra.mxu0 0.0
      %650 = vmatprep.subr.mxu0 0.0
      %651 = vmatpush1.msra.mxu0 0.0
      %652 = vmatprep.subr.mxu0 0.0
      %653 = vmatpush1.msra.mxu0 0.0
      %654 = vmatprep.subr.mxu0 0.0
      %655 = vmatpush1.msra.mxu0 0.0
      %656 = vmatprep.subr.mxu0 0.0
      %657 = vmatpush1.msra.mxu0 0.0
      %658 = vmatprep.subr.mxu0 0.0
      %659 = vmatpush1.msra.mxu0 %v626
      %660 = vmatprep.subr.mxu0 0.0
      %661 = vmatpush2.msra.mxu0 0.0
      %662 = vmatprep.subr.mxu0 0.0
      %663 = vmatpush2.msra.mxu0 0.0
      %664 = vmatprep.subr.mxu0 0.0
      %665 = vmatpush2.msra.mxu0 0.0
      %666 = vmatprep.subr.mxu0 0.0
      %667 = vmatpush2.msra.mxu0 0.0
      %668 = vmatprep.subr.mxu0 0.0
      %669 = vmatpush2.msra.mxu0 0.0
      %670 = vmatprep.subr.mxu0 0.0
      %671 = vmatpush2.msra.mxu0 0.0
      %672 = vmatprep.subr.mxu0 0.0
      %673 = vmatpush2.msra.mxu0 0.0
      %674 = vmatprep.subr.mxu0 0.0
      %675 = vmatpush2.msra.mxu0 0.0
      %676 = vmatprep.subr.mxu0 0.0
      %677 = vmatpush2.msra.mxu0 0.0
      %678 = vmatprep.subr.mxu0 0.0
      %679 = vmatpush2.msra.mxu0 0.0
      %680 = vmatprep.subr.mxu0 0.0
      %681 = vmatpush2.msra.mxu0 0.0
      %682 = vmatprep.subr.mxu0 0.0
      %683 = vmatpush2.msra.mxu0 0.0
      %684 = vmatprep.subr.mxu0 0.0
      %685 = vmatpush2.msra.mxu0 0.0
      %686 = vmatprep.subr.mxu0 0.0
      %687 = vmatpush2.msra.mxu0 0.0
      %688 = vmatprep.subr.mxu0 0.0
      %689 = vmatpush2.msra.mxu0 0.0
      %690 = vmatprep.subr.mxu0 0.0
      %691 = vmatpush2.msra.mxu0 0.0
      %692 = vmatprep.mubr.f32.mxu0 0.0
      %693 = vmatmul.mubr.f32.gmra.mxu0 %v624
      %v694 = vpop.f32.mrf.mxu0
      %v695 = vadd.f32 0.0, %v694
      %v696 = vpop.f32.mrf.mxu0
      %697 = vdwg.mxu0
      %v698 = vadd.f32 %v614, %v695
      %s699 = scalar_lea.vmem %s2, 32
      %v700 = vld [vmem:[%s699] sm:$0x7f]
      %701 = vrot.lane.b32.xlu0 %v361, 20
      %v702 = vpop.permute.xlu0 %701
      %703 = vrot.lane.b32.xlu0 %v360, 20
      %v704 = vpop.permute.xlu0 %703
      %vm705 = vcmask 162816
      %v706 = vsel %vm705, %v702, %v704
      %v708 = vsel %vm373, %v700, 0
      %v710 = vsel %vm377, %v706, 0
      %712 = vmatprep.subr.mxu0 0.0
      %713 = vmatpush1.msra.mxu0 0.0
      %714 = vmatprep.subr.mxu0 0.0
      %715 = vmatpush1.msra.mxu0 0.0
      %716 = vmatprep.subr.mxu0 0.0
      %717 = vmatpush1.msra.mxu0 0.0
      %718 = vmatprep.subr.mxu0 0.0
      %719 = vmatpush1.msra.mxu0 0.0
      %720 = vmatprep.subr.mxu0 0.0
      %721 = vmatpush1.msra.mxu0 0.0
      %722 = vmatprep.subr.mxu0 0.0
      %723 = vmatpush1.msra.mxu0 0.0
      %724 = vmatprep.subr.mxu0 0.0
      %725 = vmatpush1.msra.mxu0 0.0
      %726 = vmatprep.subr.mxu0 0.0
      %727 = vmatpush1.msra.mxu0 0.0
      %728 = vmatprep.subr.mxu0 0.0
      %729 = vmatpush1.msra.mxu0 0.0
      %730 = vmatprep.subr.mxu0 0.0
      %731 = vmatpush1.msra.mxu0 0.0
      %732 = vmatprep.subr.mxu0 0.0
      %733 = vmatpush1.msra.mxu0 0.0
      %734 = vmatprep.subr.mxu0 0.0
      %735 = vmatpush1.msra.mxu0 0.0
      %736 = vmatprep.subr.mxu0 0.0
      %737 = vmatpush1.msra.mxu0 0.0
      %738 = vmatprep.subr.mxu0 0.0
      %739 = vmatpush1.msra.mxu0 0.0
      %740 = vmatprep.subr.mxu0 0.0
      %741 = vmatpush1.msra.mxu0 0.0
      %742 = vmatprep.subr.mxu0 0.0
      %743 = vmatpush1.msra.mxu0 %v710
      %744 = vmatprep.subr.mxu0 0.0
      %745 = vmatpush2.msra.mxu0 0.0
      %746 = vmatprep.subr.mxu0 0.0
      %747 = vmatpush2.msra.mxu0 0.0
      %748 = vmatprep.subr.mxu0 0.0
      %749 = vmatpush2.msra.mxu0 0.0
      %750 = vmatprep.subr.mxu0 0.0
      %751 = vmatpush2.msra.mxu0 0.0
      %752 = vmatprep.subr.mxu0 0.0
      %753 = vmatpush2.msra.mxu0 0.0
      %754 = vmatprep.subr.mxu0 0.0
      %755 = vmatpush2.msra.mxu0 0.0
      %756 = vmatprep.subr.mxu0 0.0
      %757 = vmatpush2.msra.mxu0 0.0
      %758 = vmatprep.subr.mxu0 0.0
      %759 = vmatpush2.msra.mxu0 0.0
      %760 = vmatprep.subr.mxu0 0.0
      %761 = vmatpush2.msra.mxu0 0.0
      %762 = vmatprep.subr.mxu0 0.0
      %763 = vmatpush2.msra.mxu0 0.0
      %764 = vmatprep.subr.mxu0 0.0
      %765 = vmatpush2.msra.mxu0 0.0
      %766 = vmatprep.subr.mxu0 0.0
      %767 = vmatpush2.msra.mxu0 0.0
      %768 = vmatprep.subr.mxu0 0.0
      %769 = vmatpush2.msra.mxu0 0.0
      %770 = vmatprep.subr.mxu0 0.0
      %771 = vmatpush2.msra.mxu0 0.0
      %772 = vmatprep.subr.mxu0 0.0
      %773 = vmatpush2.msra.mxu0 0.0
      %774 = vmatprep.subr.mxu0 0.0
      %775 = vmatpush2.msra.mxu0 0.0
      %776 = vmatprep.mubr.f32.mxu0 0.0
      %777 = vmatmul.mubr.f32.gmra.mxu0 %v708
      %v778 = vpop.f32.mrf.mxu0
      %v779 = vadd.f32 0.0, %v778
      %v780 = vpop.f32.mrf.mxu0
      %781 = vdwg.mxu0
      %v782 = vadd.f32 %v698, %v779
      %v783 = vld [vmem:[%s3] sm:$0x7f]
      %785 = vset.pattern.permute.xlu0 0
      %786 = vperm.xlu0 %785, %v783
      %v787 = vpop.permute.xlu0 %786
      %v789 = vadd.f32 %v782, %v787
      %vm790 = vcmask 292864
      %791 = vst.msk [vmem:[#allocation2] sm:$0x7f] %vm790, %v789
      %p792 = scmp.eq.s32.totalorder %s24, 0
      // Predicated region
      $region53: #{tpu_custom_call.1} parent=51 // pred_check
        %p793 = pneg %p792
      $region54: #{tpu_custom_call.1} parent=51 // pred_check_branch
        %795 = sbr.rel (%p793) target = $region56
      $region55: #{tpu_custom_call.1} parent=51 // pred_region
        %vm796 = vcmask 161792
        %797 = vst.msk [vmem:[#allocation2] sm:$0x7f] %vm796, 0.0
      $region56: #{tpu_custom_call.1} parent=51 // pred_fallthru
        _
      %v798 = vld [vmem:[%s4] sm:$0x7f]
      %v799 = vld [vmem:[#allocation2] sm:$0x7f]
      %s800 = scalar_lea.vmem %s4, 8
      %v801 = vld [vmem:[%s800] sm:$0x7f]
      %803 = vrot.lane.b32.xlu0 %v799, 123
      %v804 = vpop.permute.xlu0 %803
      %v806 = vsel %vm373, %v801, 0
      %v808 = vsel %vm377, %v804, 0
      %810 = vmatprep.subr.mxu0 0.0
      %811 = vmatpush1.msra.mxu0 0.0
      %812 = vmatprep.subr.mxu0 0.0
      %813 = vmatpush1.msra.mxu0 0.0
      %814 = vmatprep.subr.mxu0 0.0
      %815 = vmatpush1.msra.mxu0 0.0
      %816 = vmatprep.subr.mxu0 0.0
      %817 = vmatpush1.msra.mxu0 0.0
      %818 = vmatprep.subr.mxu0 0.0
      %819 = vmatpush1.msra.mxu0 0.0
      %820 = vmatprep.subr.mxu0 0.0
      %821 = vmatpush1.msra.mxu0 0.0
      %822 = vmatprep.subr.mxu0 0.0
      %823 = vmatpush1.msra.mxu0 0.0
      %824 = vmatprep.subr.mxu0 0.0
      %825 = vmatpush1.msra.mxu0 0.0
      %826 = vmatprep.subr.mxu0 0.0
      %827 = vmatpush1.msra.mxu0 0.0
      %828 = vmatprep.subr.mxu0 0.0
      %829 = vmatpush1.msra.mxu0 0.0
      %830 = vmatprep.subr.mxu0 0.0
      %831 = vmatpush1.msra.mxu0 0.0
      %832 = vmatprep.subr.mxu0 0.0
      %833 = vmatpush1.msra.mxu0 0.0
      %834 = vmatprep.subr.mxu0 0.0
      %835 = vmatpush1.msra.mxu0 0.0
      %836 = vmatprep.subr.mxu0 0.0
      %837 = vmatpush1.msra.mxu0 0.0
      %838 = vmatprep.subr.mxu0 0.0
      %839 = vmatpush1.msra.mxu0 0.0
      %840 = vmatprep.subr.mxu0 0.0
      %841 = vmatpush1.msra.mxu0 %v808
      %842 = vmatprep.subr.mxu0 0.0
      %843 = vmatpush2.msra.mxu0 0.0
      %844 = vmatprep.subr.mxu0 0.0
      %845 = vmatpush2.msra.mxu0 0.0
      %846 = vmatprep.subr.mxu0 0.0
      %847 = vmatpush2.msra.mxu0 0.0
      %848 = vmatprep.subr.mxu0 0.0
      %849 = vmatpush2.msra.mxu0 0.0
      %850 = vmatprep.subr.mxu0 0.0
      %851 = vmatpush2.msra.mxu0 0.0
      %852 = vmatprep.subr.mxu0 0.0
      %853 = vmatpush2.msra.mxu0 0.0
      %854 = vmatprep.subr.mxu0 0.0
      %855 = vmatpush2.msra.mxu0 0.0
      %856 = vmatprep.subr.mxu0 0.0
      %857 = vmatpush2.msra.mxu0 0.0
      %858 = vmatprep.subr.mxu0 0.0
      %859 = vmatpush2.msra.mxu0 0.0
      %860 = vmatprep.subr.mxu0 0.0
      %861 = vmatpush2.msra.mxu0 0.0
      %862 = vmatprep.subr.mxu0 0.0
      %863 = vmatpush2.msra.mxu0 0.0
      %864 = vmatprep.subr.mxu0 0.0
      %865 = vmatpush2.msra.mxu0 0.0
      %866 = vmatprep.subr.mxu0 0.0
      %867 = vmatpush2.msra.mxu0 0.0
      %868 = vmatprep.subr.mxu0 0.0
      %869 = vmatpush2.msra.mxu0 0.0
      %870 = vmatprep.subr.mxu0 0.0
      %871 = vmatpush2.msra.mxu0 0.0
      %872 = vmatprep.subr.mxu0 0.0
      %873 = vmatpush2.msra.mxu0 0.0
      %874 = vmatprep.mubr.f32.mxu0 0.0
      %875 = vmatmul.mubr.f32.gmra.mxu0 %v806
      %v876 = vpop.f32.mrf.mxu0
      %v877 = vadd.f32 0.0, %v876
      %v878 = vpop.f32.mrf.mxu0
      %879 = vdwg.mxu0
      %v881 = vsel %vm373, %v798, 0
      %v883 = vsel %vm377, %v799, 0
      %885 = vmatprep.subr.mxu0 0.0
      %886 = vmatpush1.msra.mxu0 0.0
      %887 = vmatprep.subr.mxu0 0.0
      %888 = vmatpush1.msra.mxu0 0.0
      %889 = vmatprep.subr.mxu0 0.0
      %890 = vmatpush1.msra.mxu0 0.0
      %891 = vmatprep.subr.mxu0 0.0
      %892 = vmatpush1.msra.mxu0 0.0
      %893 = vmatprep.subr.mxu0 0.0
      %894 = vmatpush1.msra.mxu0 0.0
      %895 = vmatprep.subr.mxu0 0.0
      %896 = vmatpush1.msra.mxu0 0.0
      %897 = vmatprep.subr.mxu0 0.0
      %898 = vmatpush1.msra.mxu0 0.0
      %899 = vmatprep.subr.mxu0 0.0
      %900 = vmatpush1.msra.mxu0 0.0
      %901 = vmatprep.subr.mxu0 0.0
      %902 = vmatpush1.msra.mxu0 0.0
      %903 = vmatprep.subr.mxu0 0.0
      %904 = vmatpush1.msra.mxu0 0.0
      %905 = vmatprep.subr.mxu0 0.0
      %906 = vmatpush1.msra.mxu0 0.0
      %907 = vmatprep.subr.mxu0 0.0
      %908 = vmatpush1.msra.mxu0 0.0
      %909 = vmatprep.subr.mxu0 0.0
      %910 = vmatpush1.msra.mxu0 0.0
      %911 = vmatprep.subr.mxu0 0.0
      %912 = vmatpush1.msra.mxu0 0.0
      %913 = vmatprep.subr.mxu0 0.0
      %914 = vmatpush1.msra.mxu0 0.0
      %915 = vmatprep.subr.mxu0 0.0
      %916 = vmatpush1.msra.mxu0 %v883
      %917 = vmatprep.subr.mxu0 0.0
      %918 = vmatpush2.msra.mxu0 0.0
      %919 = vmatprep.subr.mxu0 0.0
      %920 = vmatpush2.msra.mxu0 0.0
      %921 = vmatprep.subr.mxu0 0.0
      %922 = vmatpush2.msra.mxu0 0.0
      %923 = vmatprep.subr.mxu0 0.0
      %924 = vmatpush2.msra.mxu0 0.0
      %925 = vmatprep.subr.mxu0 0.0
      %926 = vmatpush2.msra.mxu0 0.0
      %927 = vmatprep.subr.mxu0 0.0
      %928 = vmatpush2.msra.mxu0 0.0
      %929 = vmatprep.subr.mxu0 0.0
      %930 = vmatpush2.msra.mxu0 0.0
      %931 = vmatprep.subr.mxu0 0.0
      %932 = vmatpush2.msra.mxu0 0.0
      %933 = vmatprep.subr.mxu0 0.0
      %934 = vmatpush2.msra.mxu0 0.0
      %935 = vmatprep.subr.mxu0 0.0
      %936 = vmatpush2.msra.mxu0 0.0
      %937 = vmatprep.subr.mxu0 0.0
      %938 = vmatpush2.msra.mxu0 0.0
      %939 = vmatprep.subr.mxu0 0.0
      %940 = vmatpush2.msra.mxu0 0.0
      %941 = vmatprep.subr.mxu0 0.0
      %942 = vmatpush2.msra.mxu0 0.0
      %943 = vmatprep.subr.mxu0 0.0
      %944 = vmatpush2.msra.mxu0 0.0
      %945 = vmatprep.subr.mxu0 0.0
      %946 = vmatpush2.msra.mxu0 0.0
      %947 = vmatprep.subr.mxu0 0.0
      %948 = vmatpush2.msra.mxu0 0.0
      %949 = vmatprep.mubr.f32.mxu0 0.0
      %950 = vmatmul.mubr.f32.gmra.mxu0 %v881
      %v951 = vpop.f32.mrf.mxu0
      %v952 = vadd.f32 %v877, %v951
      %v953 = vpop.f32.mrf.mxu0
      %954 = vdwg.mxu0
      %s955 = scalar_lea.vmem %s4, 16
      %v956 = vld [vmem:[%s955] sm:$0x7f]
      %957 = vrot.lane.b32.xlu0 %v799, 118
      %v958 = vpop.permute.xlu0 %957
      %v960 = vsel %vm373, %v956, 0
      %v962 = vsel %vm377, %v958, 0
      %964 = vmatprep.subr.mxu0 0.0
      %965 = vmatpush1.msra.mxu0 0.0
      %966 = vmatprep.subr.mxu0 0.0
      %967 = vmatpush1.msra.mxu0 0.0
      %968 = vmatprep.subr.mxu0 0.0
      %969 = vmatpush1.msra.mxu0 0.0
      %970 = vmatprep.subr.mxu0 0.0
      %971 = vmatpush1.msra.mxu0 0.0
      %972 = vmatprep.subr.mxu0 0.0
      %973 = vmatpush1.msra.mxu0 0.0
      %974 = vmatprep.subr.mxu0 0.0
      %975 = vmatpush1.msra.mxu0 0.0
      %976 = vmatprep.subr.mxu0 0.0
      %977 = vmatpush1.msra.mxu0 0.0
      %978 = vmatprep.subr.mxu0 0.0
      %979 = vmatpush1.msra.mxu0 0.0
      %980 = vmatprep.subr.mxu0 0.0
      %981 = vmatpush1.msra.mxu0 0.0
      %982 = vmatprep.subr.mxu0 0.0
      %983 = vmatpush1.msra.mxu0 0.0
      %984 = vmatprep.subr.mxu0 0.0
      %985 = vmatpush1.msra.mxu0 0.0
      %986 = vmatprep.subr.mxu0 0.0
      %987 = vmatpush1.msra.mxu0 0.0
      %988 = vmatprep.subr.mxu0 0.0
      %989 = vmatpush1.msra.mxu0 0.0
      %990 = vmatprep.subr.mxu0 0.0
      %991 = vmatpush1.msra.mxu0 0.0
      %992 = vmatprep.subr.mxu0 0.0
      %993 = vmatpush1.msra.mxu0 0.0
      %994 = vmatprep.subr.mxu0 0.0
      %995 = vmatpush1.msra.mxu0 %v962
      %996 = vmatprep.subr.mxu0 0.0
      %997 = vmatpush2.msra.mxu0 0.0
      %998 = vmatprep.subr.mxu0 0.0
      %999 = vmatpush2.msra.mxu0 0.0
      %1000 = vmatprep.subr.mxu0 0.0
      %1001 = vmatpush2.msra.mxu0 0.0
      %1002 = vmatprep.subr.mxu0 0.0
      %1003 = vmatpush2.msra.mxu0 0.0
      %1004 = vmatprep.subr.mxu0 0.0
      %1005 = vmatpush2.msra.mxu0 0.0
      %1006 = vmatprep.subr.mxu0 0.0
      %1007 = vmatpush2.msra.mxu0 0.0
      %1008 = vmatprep.subr.mxu0 0.0
      %1009 = vmatpush2.msra.mxu0 0.0
      %1010 = vmatprep.subr.mxu0 0.0
      %1011 = vmatpush2.msra.mxu0 0.0
      %1012 = vmatprep.subr.mxu0 0.0
      %1013 = vmatpush2.msra.mxu0 0.0
      %1014 = vmatprep.subr.mxu0 0.0
      %1015 = vmatpush2.msra.mxu0 0.0
      %1016 = vmatprep.subr.mxu0 0.0
      %1017 = vmatpush2.msra.mxu0 0.0
      %1018 = vmatprep.subr.mxu0 0.0
      %1019 = vmatpush2.msra.mxu0 0.0
      %1020 = vmatprep.subr.mxu0 0.0
      %1021 = vmatpush2.msra.mxu0 0.0
      %1022 = vmatprep.subr.mxu0 0.0
      %1023 = vmatpush2.msra.mxu0 0.0
      %1024 = vmatprep.subr.mxu0 0.0
      %1025 = vmatpush2.msra.mxu0 0.0
      %1026 = vmatprep.subr.mxu0 0.0
      %1027 = vmatpush2.msra.mxu0 0.0
      %1028 = vmatprep.mubr.f32.mxu0 0.0
      %1029 = vmatmul.mubr.f32.gmra.mxu0 %v960
      %v1030 = vpop.f32.mrf.mxu0
      %v1031 = vadd.f32 0.0, %v1030
      %v1032 = vpop.f32.mrf.mxu0
      %1033 = vdwg.mxu0
      %v1034 = vadd.f32 %v952, %v1031
      %s1035 = scalar_lea.vmem %s4, 24
      %v1036 = vld [vmem:[%s1035] sm:$0x7f]
      %1037 = vrot.lane.b32.xlu0 %v799, 113
      %v1038 = vpop.permute.xlu0 %1037
      %v1040 = vsel %vm373, %v1036, 0
      %v1042 = vsel %vm377, %v1038, 0
      %1044 = vmatprep.subr.mxu0 0.0
      %1045 = vmatpush1.msra.mxu0 0.0
      %1046 = vmatprep.subr.mxu0 0.0
      %1047 = vmatpush1.msra.mxu0 0.0
      %1048 = vmatprep.subr.mxu0 0.0
      %1049 = vmatpush1.msra.mxu0 0.0
      %1050 = vmatprep.subr.mxu0 0.0
      %1051 = vmatpush1.msra.mxu0 0.0
      %1052 = vmatprep.subr.mxu0 0.0
      %1053 = vmatpush1.msra.mxu0 0.0
      %1054 = vmatprep.subr.mxu0 0.0
      %1055 = vmatpush1.msra.mxu0 0.0
      %1056 = vmatprep.subr.mxu0 0.0
      %1057 = vmatpush1.msra.mxu0 0.0
      %1058 = vmatprep.subr.mxu0 0.0
      %1059 = vmatpush1.msra.mxu0 0.0
      %1060 = vmatprep.subr.mxu0 0.0
      %1061 = vmatpush1.msra.mxu0 0.0
      %1062 = vmatprep.subr.mxu0 0.0
      %1063 = vmatpush1.msra.mxu0 0.0
      %1064 = vmatprep.subr.mxu0 0.0
      %1065 = vmatpush1.msra.mxu0 0.0
      %1066 = vmatprep.subr.mxu0 0.0
      %1067 = vmatpush1.msra.mxu0 0.0
      %1068 = vmatprep.subr.mxu0 0.0
      %1069 = vmatpush1.msra.mxu0 0.0
      %1070 = vmatprep.subr.mxu0 0.0
      %1071 = vmatpush1.msra.mxu0 0.0
      %1072 = vmatprep.subr.mxu0 0.0
      %1073 = vmatpush1.msra.mxu0 0.0
      %1074 = vmatprep.subr.mxu0 0.0
      %1075 = vmatpush1.msra.mxu0 %v1042
      %1076 = vmatprep.subr.mxu0 0.0
      %1077 = vmatpush2.msra.mxu0 0.0
      %1078 = vmatprep.subr.mxu0 0.0
      %1079 = vmatpush2.msra.mxu0 0.0
      %1080 = vmatprep.subr.mxu0 0.0
      %1081 = vmatpush2.msra.mxu0 0.0
      %1082 = vmatprep.subr.mxu0 0.0
      %1083 = vmatpush2.msra.mxu0 0.0
      %1084 = vmatprep.subr.mxu0 0.0
      %1085 = vmatpush2.msra.mxu0 0.0
      %1086 = vmatprep.subr.mxu0 0.0
      %1087 = vmatpush2.msra.mxu0 0.0
      %1088 = vmatprep.subr.mxu0 0.0
      %1089 = vmatpush2.msra.mxu0 0.0
      %1090 = vmatprep.subr.mxu0 0.0
      %1091 = vmatpush2.msra.mxu0 0.0
      %1092 = vmatprep.subr.mxu0 0.0
      %1093 = vmatpush2.msra.mxu0 0.0
      %1094 = vmatprep.subr.mxu0 0.0
      %1095 = vmatpush2.msra.mxu0 0.0
      %1096 = vmatprep.subr.mxu0 0.0
      %1097 = vmatpush2.msra.mxu0 0.0
      %1098 = vmatprep.subr.mxu0 0.0
      %1099 = vmatpush2.msra.mxu0 0.0
      %1100 = vmatprep.subr.mxu0 0.0
      %1101 = vmatpush2.msra.mxu0 0.0
      %1102 = vmatprep.subr.mxu0 0.0
      %1103 = vmatpush2.msra.mxu0 0.0
      %1104 = vmatprep.subr.mxu0 0.0
      %1105 = vmatpush2.msra.mxu0 0.0
      %1106 = vmatprep.subr.mxu0 0.0
      %1107 = vmatpush2.msra.mxu0 0.0
      %1108 = vmatprep.mubr.f32.mxu0 0.0
      %1109 = vmatmul.mubr.f32.gmra.mxu0 %v1040
      %v1110 = vpop.f32.mrf.mxu0
      %v1111 = vadd.f32 0.0, %v1110
      %v1112 = vpop.f32.mrf.mxu0
      %1113 = vdwg.mxu0
      %v1114 = vadd.f32 %v1034, %v1111
      %s1115 = scalar_lea.vmem %s4, 32
      %v1116 = vld [vmem:[%s1115] sm:$0x7f]
      %1117 = vrot.lane.b32.xlu0 %v799, 108
      %v1118 = vpop.permute.xlu0 %1117
      %v1120 = vsel %vm373, %v1116, 0
      %v1122 = vsel %vm377, %v1118, 0
      %1124 = vmatprep.subr.mxu0 0.0
      %1125 = vmatpush1.msra.mxu0 0.0
      %1126 = vmatprep.subr.mxu0 0.0
      %1127 = vmatpush1.msra.mxu0 0.0
      %1128 = vmatprep.subr.mxu0 0.0
      %1129 = vmatpush1.msra.mxu0 0.0
      %1130 = vmatprep.subr.mxu0 0.0
      %1131 = vmatpush1.msra.mxu0 0.0
      %1132 = vmatprep.subr.mxu0 0.0
      %1133 = vmatpush1.msra.mxu0 0.0
      %1134 = vmatprep.subr.mxu0 0.0
      %1135 = vmatpush1.msra.mxu0 0.0
      %1136 = vmatprep.subr.mxu0 0.0
      %1137 = vmatpush1.msra.mxu0 0.0
      %1138 = vmatprep.subr.mxu0 0.0
      %1139 = vmatpush1.msra.mxu0 0.0
      %1140 = vmatprep.subr.mxu0 0.0
      %1141 = vmatpush1.msra.mxu0 0.0
      %1142 = vmatprep.subr.mxu0 0.0
      %1143 = vmatpush1.msra.mxu0 0.0
      %1144 = vmatprep.subr.mxu0 0.0
      %1145 = vmatpush1.msra.mxu0 0.0
      %1146 = vmatprep.subr.mxu0 0.0
      %1147 = vmatpush1.msra.mxu0 0.0
      %1148 = vmatprep.subr.mxu0 0.0
      %1149 = vmatpush1.msra.mxu0 0.0
      %1150 = vmatprep.subr.mxu0 0.0
      %1151 = vmatpush1.msra.mxu0 0.0
      %1152 = vmatprep.subr.mxu0 0.0
      %1153 = vmatpush1.msra.mxu0 0.0
      %1154 = vmatprep.subr.mxu0 0.0
      %1155 = vmatpush1.msra.mxu0 %v1122
      %1156 = vmatprep.subr.mxu0 0.0
      %1157 = vmatpush2.msra.mxu0 0.0
      %1158 = vmatprep.subr.mxu0 0.0
      %1159 = vmatpush2.msra.mxu0 0.0
      %1160 = vmatprep.subr.mxu0 0.0
      %1161 = vmatpush2.msra.mxu0 0.0
      %1162 = vmatprep.subr.mxu0 0.0
      %1163 = vmatpush2.msra.mxu0 0.0
      %1164 = vmatprep.subr.mxu0 0.0
      %1165 = vmatpush2.msra.mxu0 0.0
      %1166 = vmatprep.subr.mxu0 0.0
      %1167 = vmatpush2.msra.mxu0 0.0
      %1168 = vmatprep.subr.mxu0 0.0
      %1169 = vmatpush2.msra.mxu0 0.0
      %1170 = vmatprep.subr.mxu0 0.0
      %1171 = vmatpush2.msra.mxu0 0.0
      %1172 = vmatprep.subr.mxu0 0.0
      %1173 = vmatpush2.msra.mxu0 0.0
      %1174 = vmatprep.subr.mxu0 0.0
      %1175 = vmatpush2.msra.mxu0 0.0
      %1176 = vmatprep.subr.mxu0 0.0
      %1177 = vmatpush2.msra.mxu0 0.0
      %1178 = vmatprep.subr.mxu0 0.0
      %1179 = vmatpush2.msra.mxu0 0.0
      %1180 = vmatprep.subr.mxu0 0.0
      %1181 = vmatpush2.msra.mxu0 0.0
      %1182 = vmatprep.subr.mxu0 0.0
      %1183 = vmatpush2.msra.mxu0 0.0
      %1184 = vmatprep.subr.mxu0 0.0
      %1185 = vmatpush2.msra.mxu0 0.0
      %1186 = vmatprep.subr.mxu0 0.0
      %1187 = vmatpush2.msra.mxu0 0.0
      %1188 = vmatprep.mubr.f32.mxu0 0.0
      %1189 = vmatmul.mubr.f32.gmra.mxu0 %v1120
      %v1190 = vpop.f32.mrf.mxu0
      %v1191 = vadd.f32 0.0, %v1190
      %v1192 = vpop.f32.mrf.mxu0
      %1193 = vdwg.mxu0
      %v1194 = vadd.f32 %v1114, %v1191
      %v1195 = vld [vmem:[%s5] sm:$0x7f]
      %1197 = vset.pattern.permute.xlu0 0
      %1198 = vperm.xlu0 %1197, %v1195
      %v1199 = vpop.permute.xlu0 %1198
      %v1201 = vadd.f32 %v1194, %v1199
      %v1202 = vmax.f32 %v1201, 0.0
      %v1203 = vld [vmem:[%s6] sm:$0x7f]
      %v1204 = vld [vmem:[%s7] sm:$0x7f]
      %1206 = vset.pattern.permute.xlu0 0
      %1207 = vperm.xlu0 %1206, %v1204
      %v1208 = vpop.permute.xlu0 %1207
      %v1211 = vsel %vm373, %v1203, 0
      %v1214 = vsel %vm377, %v1202, 0
      %1216 = vmatprep.subr.mxu0 0.0
      %1217 = vmatpush1.msra.mxu0 0.0
      %1218 = vmatprep.subr.mxu0 0.0
      %1219 = vmatpush1.msra.mxu0 0.0
      %1220 = vmatprep.subr.mxu0 0.0
      %1221 = vmatpush1.msra.mxu0 0.0
      %1222 = vmatprep.subr.mxu0 0.0
      %1223 = vmatpush1.msra.mxu0 0.0
      %1224 = vmatprep.subr.mxu0 0.0
      %1225 = vmatpush1.msra.mxu0 0.0
      %1226 = vmatprep.subr.mxu0 0.0
      %1227 = vmatpush1.msra.mxu0 0.0
      %1228 = vmatprep.subr.mxu0 0.0
      %1229 = vmatpush1.msra.mxu0 0.0
      %1230 = vmatprep.subr.mxu0 0.0
      %1231 = vmatpush1.msra.mxu0 0.0
      %1232 = vmatprep.subr.mxu0 0.0
      %1233 = vmatpush1.msra.mxu0 0.0
      %1234 = vmatprep.subr.mxu0 0.0
      %1235 = vmatpush1.msra.mxu0 0.0
      %1236 = vmatprep.subr.mxu0 0.0
      %1237 = vmatpush1.msra.mxu0 0.0
      %1238 = vmatprep.subr.mxu0 0.0
      %1239 = vmatpush1.msra.mxu0 0.0
      %1240 = vmatprep.subr.mxu0 0.0
      %1241 = vmatpush1.msra.mxu0 0.0
      %1242 = vmatprep.subr.mxu0 0.0
      %1243 = vmatpush1.msra.mxu0 0.0
      %1244 = vmatprep.subr.mxu0 0.0
      %1245 = vmatpush1.msra.mxu0 0.0
      %1246 = vmatprep.subr.mxu0 0.0
      %1247 = vmatpush1.msra.mxu0 %v1214
      %1248 = vmatprep.subr.mxu0 0.0
      %1249 = vmatpush2.msra.mxu0 0.0
      %1250 = vmatprep.subr.mxu0 0.0
      %1251 = vmatpush2.msra.mxu0 0.0
      %1252 = vmatprep.subr.mxu0 0.0
      %1253 = vmatpush2.msra.mxu0 0.0
      %1254 = vmatprep.subr.mxu0 0.0
      %1255 = vmatpush2.msra.mxu0 0.0
      %1256 = vmatprep.subr.mxu0 0.0
      %1257 = vmatpush2.msra.mxu0 0.0
      %1258 = vmatprep.subr.mxu0 0.0
      %1259 = vmatpush2.msra.mxu0 0.0
      %1260 = vmatprep.subr.mxu0 0.0
      %1261 = vmatpush2.msra.mxu0 0.0
      %1262 = vmatprep.subr.mxu0 0.0
      %1263 = vmatpush2.msra.mxu0 0.0
      %1264 = vmatprep.subr.mxu0 0.0
      %1265 = vmatpush2.msra.mxu0 0.0
      %1266 = vmatprep.subr.mxu0 0.0
      %1267 = vmatpush2.msra.mxu0 0.0
      %1268 = vmatprep.subr.mxu0 0.0
      %1269 = vmatpush2.msra.mxu0 0.0
      %1270 = vmatprep.subr.mxu0 0.0
      %1271 = vmatpush2.msra.mxu0 0.0
      %1272 = vmatprep.subr.mxu0 0.0
      %1273 = vmatpush2.msra.mxu0 0.0
      %1274 = vmatprep.subr.mxu0 0.0
      %1275 = vmatpush2.msra.mxu0 0.0
      %1276 = vmatprep.subr.mxu0 0.0
      %1277 = vmatpush2.msra.mxu0 0.0
      %1278 = vmatprep.subr.mxu0 0.0
      %1279 = vmatpush2.msra.mxu0 0.0
      %1280 = vmatprep.mubr.f32.mxu0 0.0
      %1281 = vmatmul.mubr.f32.gmra.mxu0 %v1211
      %v1282 = vpop.f32.mrf.mxu0
      %v1283 = vadd.f32 %v1208, %v1282
      %v1284 = vpop.f32.mrf.mxu0
      %1285 = vdwg.mxu0
      %v1286 = vadd.f32 %v360, %v1283
      %vm1287 = vcmask 129024
      %1288 = vst.msk [vmem:[%s359] sm:$0x7f] %vm1287, %v1286
      %p1289 = scmp.lt.s32.totalorder %s23, 1
      %s1290 = scalar_select %p1289, %s23, 1
      %p1291 = scmp.lt.s32.totalorder %s24, 0
      %s1292 = scalar_select %p1291, %s24, 0
      %s1293 = sadd.s32 %s1292, %s1290
      %s1294 = smul.addr %s1293, 8
      %s1295 = scalar_lea.vmem %s8, %s1294
      // Predicated region
      $region57: #{tpu_custom_call.1} parent=51 // pred_check
        %p1296 = pneg %p233
      $region58: #{tpu_custom_call.1} parent=51 // pred_check_branch
        %1298 = sbr.rel (%p1296) target = $region60
      $region59: #{tpu_custom_call.1} parent=51 // pred_region
        _
      $region60: #{tpu_custom_call.1} parent=51 // pred_fallthru
        _
    $region52: #{tpu_custom_call.1} parent=5 // pred_fallthru
      _
    %p1299 = scmp.le.s32.totalorder 2, %s14
    // Predicated region
    $region61: #{tpu_custom_call.1} parent=5 // pred_check
      %p1300 = pneg %p1299
    $region62: #{tpu_custom_call.1} parent=5 // pred_check_branch
      %1302 = sbr.rel (%p1300) target = $region64
    $region63: #{tpu_custom_call.1} parent=5 // pred_region
      %s1303 = ssub.s32 %s14, 2
      // Predicated region
      $region65: #{tpu_custom_call.1} parent=63 // pred_check
        %p1304 = pneg %p239
      $region66: #{tpu_custom_call.1} parent=63 // pred_check_branch
        %1306 = sbr.rel (%p1304) target = $region68
      $region67: #{tpu_custom_call.1} parent=63 // pred_region
        %p1307 = scmp.lt.s32.totalorder %s25, 1
        %s1308 = scalar_select %p1307, %s25, 1
        %p1309 = scmp.lt.s32.totalorder %s26, 0
        %s1310 = scalar_select %p1309, %s26, 0
        %s1311 = sadd.s32 %s1310, %s1308
        %s1312 = smul.addr %s1311, 8
        %s1313 = scalar_lea.vmem %s8, %s1312
      $region68: #{tpu_custom_call.1} parent=63 // pred_fallthru
        _
    $region64: #{tpu_custom_call.1} parent=5 // pred_fallthru
      _
  $region6: #{tpu_custom_call.1} parent=0 // loop_footer
    %s18 = sadd.s32 1, %s14
  $region7: #{tpu_custom_call.1} parent=0 // loop_footer_branch
    %13 = sbr.rel target = $region3
  $region8: #{tpu_custom_call.1} parent=0 // loop_exit
    _

</llo_original>
